<compile_context>
chip_gen: v6e
topology: v6e:2x2x1
jax: 0.10.0
libtpu: 0.0.40
codegen_flags: <defaults>
</compile_context>

<pallas_src>
import jax
import jax.numpy as jnp
from jax import lax
from jax.experimental import pallas as pl
from jax.experimental.pallas import tpu as pltpu

NEG_SLOPE = 0.01   # nn.LeakyReLU default
BN_EPS = 1e-5      # nn.BatchNorm1d default
HALO = 2           # one zero row per side per k=3 conv, two chained convs


def _leaky_relu(x):
    return jnp.where(x > 0, x, NEG_SLOPE * x)


def _residual_block_kernel(x_ref, w1_ref, t1_ref, w2_ref, t2_ref, mask_ref, o_ref):
    """One grid step = Nb samples flattened along rows (channels last, dense C).

    x_ref   : (Nb*(L+4), C) bf16  -- each sample has 2 zero halo rows top & bottom
    wX_ref  : (3, C, C)     bf16  -- tap-k weight (Cin, Cout), BN scale folded in
    tX_ref  : (1, C)        f32   -- folded BN shift (incl. conv bias)
    mask_ref: (Nb*(L+4)-2,1) f32  -- zeroes each sample's two extended halo rows
    o_ref   : (Nb*(L+4), C) bf16  -- row i*(L+4)+p holds sample i, position p (p<L)
    """
    rows = x_ref.shape[0]
    r1 = rows - 2                       # conv1 extended-output rows
    r2 = rows - 4                       # conv2 output rows
    x = x_ref[...]                      # bf16 (rows, C)

    # conv1 (k=3, pad=1) + BN1 (scale folded into w1) + LeakyReLU:
    # three shifted accumulating MXU dots, dense K=C contraction per tap.
    h = jnp.dot(x[0:r1], w1_ref[0], preferred_element_type=jnp.float32)
    h = h + jnp.dot(x[1:r1 + 1], w1_ref[1], preferred_element_type=jnp.float32)
    h = h + jnp.dot(x[2:r1 + 2], w1_ref[2], preferred_element_type=jnp.float32)
    h = _leaky_relu(h + t1_ref[...])
    # Zero each sample's two extended halo rows: they become conv2's zero padding.
    h = (h * mask_ref[...]).astype(jnp.bfloat16)

    # conv2 (k=3, pad=1) + BN2 (scale folded into w2).
    y = jnp.dot(h[0:r2], w2_ref[0], preferred_element_type=jnp.float32)
    y = y + jnp.dot(h[1:r2 + 1], w2_ref[1], preferred_element_type=jnp.float32)
    y = y + jnp.dot(h[2:r2 + 2], w2_ref[2], preferred_element_type=jnp.float32)
    y = y + t2_ref[...]

    # Residual add (output row q <-> original data row q+2) + LeakyReLU.
    y = y + x[2:r2 + 2].astype(jnp.float32)
    o_ref[0:r2, :] = _leaky_relu(y).astype(o_ref.dtype)
    # Rows [r2, rows) of this block are never valid outputs; sliced off in wrapper.


def residual_block_pallas(x_ncl, params, nb=None):
    """x_ncl: (N, C, L) float32, PyTorch layout. Returns (N, C, L). Eval-mode BN."""
    (w1, b1, g1, be1, m1, v1, w2, b2, g2, be2, m2, v2) = params
    n, c, l = x_ncl.shape
    s_len = l + 2 * HALO                          # rows per sample incl. halo

    # Samples per grid step: target M = nb*s_len - 2 >= ~128 for MXU fill while
    # keeping the block's sublane dim (nb*s_len) a multiple of 8.
    if nb is None:
        nb = min(n, max(1, -(-130 // s_len)))
    while (nb * s_len) % 8:
        nb += 1
    n_pad = -(-n // nb) * nb                      # pad batch to a multiple of nb

    # Fold eval-mode BN (+ conv bias) into per-channel weight scale & shift.
    def fold(w, b, gamma, beta, mean, var):
        s = gamma / jnp.sqrt(var + BN_EPS)                               # (Cout,)
        t = (beta + (b - mean) * s).reshape(1, c).astype(jnp.float32)
        # torch conv weight (Cout, Cin, K) -> per-tap (K, Cin, Cout), scale folded.
        wk = jnp.transpose(w * s[:, None, None], (2, 1, 0)).astype(jnp.bfloat16)
        return wk, t

    w1k, t1 = fold(w1, b1, g1, be1, m1, v1)
    w2k, t2 = fold(w2, b2, g2, be2, m2, v2)

    # Mask that zeroes each sample's two extended conv1 halo rows before conv2.
    r = jnp.arange(nb * s_len - 2) % s_len
    halo_mask = jnp.where((r == 0) | (r == l + 1), 0.0, 1.0)
    halo_mask = halo_mask.reshape(-1, 1).astype(jnp.float32)

    # NCL -> NLC, add per-sample 2-row zero halos, flatten (batch, length) rows.
    # TODO(synk): if this block sits in a chain of layers, keep activations in this
    #             flat NLC layout between layers instead of converting every call.
    x_nlc = jnp.transpose(x_ncl, (0, 2, 1))                             # (N, L, C)
    x_nlc = jnp.pad(x_nlc, ((0, n_pad - n), (HALO, HALO), (0, 0)))      # (Np,L+4,C)
    x_flat = x_nlc.reshape(n_pad * s_len, c).astype(jnp.bfloat16)

    rows_blk = nb * s_len
    # TODO(synk): mark the resident operands with pipeline_mode=pl.Buffered(1) to
    #             drop their unused second pipeline buffer (v7x 64 MiB VMEM).
    out_flat = pl.pallas_call(
        _residual_block_kernel,
        out_shape=jax.ShapeDtypeStruct((n_pad * s_len, c), jnp.bfloat16),
        grid=(n_pad // nb,),
        in_specs=[
            pl.BlockSpec((rows_blk, c), lambda i: (i, 0)),        # activations
            pl.BlockSpec((3, c, c), lambda i: (0, 0, 0)),         # w1 taps (resident)
            pl.BlockSpec((1, c), lambda i: (0, 0)),               # t1 (resident)
            pl.BlockSpec((3, c, c), lambda i: (0, 0, 0)),         # w2 taps (resident)
            pl.BlockSpec((1, c), lambda i: (0, 0)),               # t2 (resident)
            pl.BlockSpec((rows_blk - 2, 1), lambda i: (0, 0)),    # halo mask (resident)
        ],
        out_specs=pl.BlockSpec((rows_blk, c), lambda i: (i, 0)),
        compiler_params=pltpu.CompilerParams(
            dimension_semantics=("parallel",),
            vmem_limit_bytes=32 * 1024 * 1024),
    )(x_flat, w1k, t1, w2k, t2, halo_mask)

    out = out_flat.reshape(n_pad, s_len, c)[:n, :l, :]            # valid rows only
    return jnp.transpose(out, (0, 2, 1)).astype(x_ncl.dtype)      # NLC -> NCL


# ---------------- pure-JAX reference (independent: lax.conv, f32) ----------------
def residual_block_ref(x_ncl, params):
    (w1, b1, g1, be1, m1, v1, w2, b2, g2, be2, m2, v2) = params

    def conv1d(x, w, b):
        y = lax.conv_general_dilated(
            x, w, window_strides=(1,), padding=[(1, 1)],
            dimension_numbers=('NCH', 'OIH', 'NCH'))
        return y + b.reshape(1, -1, 1)

    def bn(x, gamma, beta, mean, var):
        return ((x - mean.reshape(1, -1, 1)) /
                jnp.sqrt(var.reshape(1, -1, 1) + BN_EPS)) * gamma.reshape(1, -1, 1) \
               + beta.reshape(1, -1, 1)

    out = _leaky_relu(bn(conv1d(x_ncl, w1, b1), g1, be1, m1, v1))
    out = bn(conv1d(out, w2, b2), g2, be2, m2, v2)
    out = out + x_ncl
    return _leaky_relu(out)


def make_params(key, c):
    ks = jax.random.split(key, 12)
    w1 = jax.random.normal(ks[0], (c, c, 3), jnp.float32) * 0.05
    b1 = jax.random.normal(ks[1], (c,), jnp.float32) * 0.1
    g1 = jax.random.uniform(ks[2], (c,), jnp.float32, 0.5, 1.5)
    be1 = jax.random.normal(ks[3], (c,), jnp.float32) * 0.1
    m1 = jax.random.normal(ks[4], (c,), jnp.float32) * 0.1
    v1 = jax.random.uniform(ks[5], (c,), jnp.float32, 0.5, 1.5)
    w2 = jax.random.normal(ks[6], (c, c, 3), jnp.float32) * 0.05
    b2 = jax.random.normal(ks[7], (c,), jnp.float32) * 0.1
    g2 = jax.random.uniform(ks[8], (c,), jnp.float32, 0.5, 1.5)
    be2 = jax.random.normal(ks[9], (c,), jnp.float32) * 0.1
    m2 = jax.random.normal(ks[10], (c,), jnp.float32) * 0.1
    v2 = jax.random.uniform(ks[11], (c,), jnp.float32, 0.5, 1.5)
    return (w1, b1, g1, be1, m1, v1, w2, b2, g2, be2, m2, v2)


if __name__ == "__main__":
    key = jax.random.PRNGKey(0)
    k_x, k_p = jax.random.split(key)

    N, C, L = 32, 32, 16                      # small Conv1d-shaped input (NCL)
    # Keep test activations exactly bf16-representable so the f32-reference
    # comparison only sees the kernel's intentional bf16 weight/intermediate I/O.
    x = jax.random.normal(k_x, (N, C, L), jnp.float32)
    x = x.astype(jnp.bfloat16).astype(jnp.float32)
    params = make_params(k_p, C)

    out = jax.block_until_ready(residual_block_pallas(x, params))
    ref = jax.block_until_ready(residual_block_ref(x, params))

    assert out.shape == (N, C, L)
    err = float(jnp.max(jnp.abs(out - ref)))
    # bf16 activation/weight I/O (per perf review) -> loosened tolerance vs f32 ref.
    assert jnp.allclose(out, ref, atol=3e-2, rtol=3e-2), err

    print("KERNEL_OK")
</pallas_src>

<mosaic_0001>
module attributes {stable_mosaic.version = 11 : i64} {
  func.func @_residual_block_kernel(%arg0: i32, %arg1: memref<160x32xbf16, #tpu.memory_space<vmem>>, %arg2: memref<3x32x32xbf16, #tpu.memory_space<vmem>>, %arg3: memref<1x32xf32, #tpu.memory_space<vmem>>, %arg4: memref<3x32x32xbf16, #tpu.memory_space<vmem>>, %arg5: memref<1x32xf32, #tpu.memory_space<vmem>>, %arg6: memref<158x1xf32, #tpu.memory_space<vmem>>, %arg7: memref<160x32xbf16, #tpu.memory_space<vmem>>) attributes {dimension_semantics = [#tpu.dimension_semantics<parallel>], iteration_bounds = array<i64: 4>, scalar_prefetch = 0 : i64, scratch_operands = 0 : i64, tpu.core_type = #tpu.core_type<tc>, window_params = [{transform_indices = @transform_0, window_bounds = array<i64: 160, 32>}, {pipeline_mode = #tpu.pipeline_mode<synchronous>, transform_indices = @transform_1, window_bounds = array<i64: 3, 32, 32>}, {pipeline_mode = #tpu.pipeline_mode<synchronous>, transform_indices = @transform_2, window_bounds = array<i64: 1, 32>}, {pipeline_mode = #tpu.pipeline_mode<synchronous>, transform_indices = @transform_3, window_bounds = array<i64: 3, 32, 32>}, {pipeline_mode = #tpu.pipeline_mode<synchronous>, transform_indices = @transform_4, window_bounds = array<i64: 1, 32>}, {pipeline_mode = #tpu.pipeline_mode<synchronous>, transform_indices = @transform_5, window_bounds = array<i64: 158, 1>}, {transform_indices = @transform_6, window_bounds = array<i64: 160, 32>}]} {
    %c0 = arith.constant 0 : index
    %c0_0 = arith.constant 0 : index
    %0 = vector.load %arg1[%c0, %c0_0] : memref<160x32xbf16, #tpu.memory_space<vmem>>, vector<160x32xbf16>
    %1 = vector.extract_strided_slice %0 {offsets = [0, 0], sizes = [158, 32], strides = [1, 1]} : vector<160x32xbf16> to vector<158x32xbf16>
    %c0_1 = arith.constant 0 : index
    %c0_2 = arith.constant 0 : index
    %c0_3 = arith.constant 0 : index
    %2 = vector.load %arg2[%c0_1, %c0_2, %c0_3] : memref<3x32x32xbf16, #tpu.memory_space<vmem>>, vector<1x32x32xbf16>
    %3 = vector.shape_cast %2 : vector<1x32x32xbf16> to vector<32x32xbf16>
    %cst = arith.constant dense<0.000000e+00> : vector<158x32xf32>
    %4 = tpu.matmul %1, %3, %cst {dimension_numbers = #tpu.dot_dimension_numbers<[1], [0], [0], [1], [0, 0, 1, 1], [], []>} : vector<158x32xbf16>, vector<32x32xbf16>, vector<158x32xf32> -> vector<158x32xf32>
    %5 = vector.extract_strided_slice %0 {offsets = [1, 0], sizes = [158, 32], strides = [1, 1]} : vector<160x32xbf16> to vector<158x32xbf16>
    %c1 = arith.constant 1 : index
    %c0_4 = arith.constant 0 : index
    %c0_5 = arith.constant 0 : index
    %6 = vector.load %arg2[%c1, %c0_4, %c0_5] : memref<3x32x32xbf16, #tpu.memory_space<vmem>>, vector<1x32x32xbf16>
    %7 = vector.shape_cast %6 : vector<1x32x32xbf16> to vector<32x32xbf16>
    %cst_6 = arith.constant dense<0.000000e+00> : vector<158x32xf32>
    %8 = tpu.matmul %5, %7, %cst_6 {dimension_numbers = #tpu.dot_dimension_numbers<[1], [0], [0], [1], [0, 0, 1, 1], [], []>} : vector<158x32xbf16>, vector<32x32xbf16>, vector<158x32xf32> -> vector<158x32xf32>
    %9 = arith.addf %4, %8 : vector<158x32xf32>
    %10 = vector.extract_strided_slice %0 {offsets = [2, 0], sizes = [158, 32], strides = [1, 1]} : vector<160x32xbf16> to vector<158x32xbf16>
    %c2 = arith.constant 2 : index
    %c0_7 = arith.constant 0 : index
    %c0_8 = arith.constant 0 : index
    %11 = vector.load %arg2[%c2, %c0_7, %c0_8] : memref<3x32x32xbf16, #tpu.memory_space<vmem>>, vector<1x32x32xbf16>
    %12 = vector.shape_cast %11 : vector<1x32x32xbf16> to vector<32x32xbf16>
    %cst_9 = arith.constant dense<0.000000e+00> : vector<158x32xf32>
    %13 = tpu.matmul %10, %12, %cst_9 {dimension_numbers = #tpu.dot_dimension_numbers<[1], [0], [0], [1], [0, 0, 1, 1], [], []>} : vector<158x32xbf16>, vector<32x32xbf16>, vector<158x32xf32> -> vector<158x32xf32>
    %14 = arith.addf %9, %13 : vector<158x32xf32>
    %c0_10 = arith.constant 0 : index
    %c0_11 = arith.constant 0 : index
    %15 = vector.load %arg3[%c0_10, %c0_11] : memref<1x32xf32, #tpu.memory_space<vmem>>, vector<1x32xf32>
    %16 = vector.broadcast %15 : vector<1x32xf32> to vector<158x32xf32>
    %17 = arith.addf %14, %16 : vector<158x32xf32>
    %cst_12 = arith.constant 0.000000e+00 : f32
    %18 = vector.broadcast %cst_12 : f32 to vector<158x32xf32>
    %19 = arith.cmpf ogt, %17, %18 : vector<158x32xf32>
    %cst_13 = arith.constant 0.00999999977 : f32
    %20 = vector.broadcast %cst_13 : f32 to vector<158x32xf32>
    %21 = arith.mulf %20, %17 : vector<158x32xf32>
    %22 = arith.select %19, %17, %21 : vector<158x32xi1>, vector<158x32xf32>
    %c0_14 = arith.constant 0 : index
    %c0_15 = arith.constant 0 : index
    %23 = vector.load %arg6[%c0_14, %c0_15] : memref<158x1xf32, #tpu.memory_space<vmem>>, vector<158x1xf32>
    %24 = vector.broadcast %23 : vector<158x1xf32> to vector<158x32xf32>
    %25 = arith.mulf %22, %24 : vector<158x32xf32>
    %26 = arith.truncf %25 : vector<158x32xf32> to vector<158x32xbf16>
    %27 = vector.extract_strided_slice %26 {offsets = [0, 0], sizes = [156, 32], strides = [1, 1]} : vector<158x32xbf16> to vector<156x32xbf16>
    %c0_16 = arith.constant 0 : index
    %c0_17 = arith.constant 0 : index
    %c0_18 = arith.constant 0 : index
    %28 = vector.load %arg4[%c0_16, %c0_17, %c0_18] : memref<3x32x32xbf16, #tpu.memory_space<vmem>>, vector<1x32x32xbf16>
    %29 = vector.shape_cast %28 : vector<1x32x32xbf16> to vector<32x32xbf16>
    %cst_19 = arith.constant dense<0.000000e+00> : vector<156x32xf32>
    %30 = tpu.matmul %27, %29, %cst_19 {dimension_numbers = #tpu.dot_dimension_numbers<[1], [0], [0], [1], [0, 0, 1, 1], [], []>} : vector<156x32xbf16>, vector<32x32xbf16>, vector<156x32xf32> -> vector<156x32xf32>
    %31 = vector.extract_strided_slice %26 {offsets = [1, 0], sizes = [156, 32], strides = [1, 1]} : vector<158x32xbf16> to vector<156x32xbf16>
    %c1_20 = arith.constant 1 : index
    %c0_21 = arith.constant 0 : index
    %c0_22 = arith.constant 0 : index
    %32 = vector.load %arg4[%c1_20, %c0_21, %c0_22] : memref<3x32x32xbf16, #tpu.memory_space<vmem>>, vector<1x32x32xbf16>
    %33 = vector.shape_cast %32 : vector<1x32x32xbf16> to vector<32x32xbf16>
    %cst_23 = arith.constant dense<0.000000e+00> : vector<156x32xf32>
    %34 = tpu.matmul %31, %33, %cst_23 {dimension_numbers = #tpu.dot_dimension_numbers<[1], [0], [0], [1], [0, 0, 1, 1], [], []>} : vector<156x32xbf16>, vector<32x32xbf16>, vector<156x32xf32> -> vector<156x32xf32>
    %35 = arith.addf %30, %34 : vector<156x32xf32>
    %36 = vector.extract_strided_slice %26 {offsets = [2, 0], sizes = [156, 32], strides = [1, 1]} : vector<158x32xbf16> to vector<156x32xbf16>
    %c2_24 = arith.constant 2 : index
    %c0_25 = arith.constant 0 : index
    %c0_26 = arith.constant 0 : index
    %37 = vector.load %arg4[%c2_24, %c0_25, %c0_26] : memref<3x32x32xbf16, #tpu.memory_space<vmem>>, vector<1x32x32xbf16>
    %38 = vector.shape_cast %37 : vector<1x32x32xbf16> to vector<32x32xbf16>
    %cst_27 = arith.constant dense<0.000000e+00> : vector<156x32xf32>
    %39 = tpu.matmul %36, %38, %cst_27 {dimension_numbers = #tpu.dot_dimension_numbers<[1], [0], [0], [1], [0, 0, 1, 1], [], []>} : vector<156x32xbf16>, vector<32x32xbf16>, vector<156x32xf32> -> vector<156x32xf32>
    %40 = arith.addf %35, %39 : vector<156x32xf32>
    %c0_28 = arith.constant 0 : index
    %c0_29 = arith.constant 0 : index
    %41 = vector.load %arg5[%c0_28, %c0_29] : memref<1x32xf32, #tpu.memory_space<vmem>>, vector<1x32xf32>
    %42 = vector.broadcast %41 : vector<1x32xf32> to vector<156x32xf32>
    %43 = arith.addf %40, %42 : vector<156x32xf32>
    %44 = vector.extract_strided_slice %0 {offsets = [2, 0], sizes = [156, 32], strides = [1, 1]} : vector<160x32xbf16> to vector<156x32xbf16>
    %45 = arith.extf %44 : vector<156x32xbf16> to vector<156x32xf32>
    %46 = arith.addf %43, %45 : vector<156x32xf32>
    %cst_30 = arith.constant 0.000000e+00 : f32
    %47 = vector.broadcast %cst_30 : f32 to vector<156x32xf32>
    %48 = arith.cmpf ogt, %46, %47 : vector<156x32xf32>
    %cst_31 = arith.constant 0.00999999977 : f32
    %49 = vector.broadcast %cst_31 : f32 to vector<156x32xf32>
    %50 = arith.mulf %49, %46 : vector<156x32xf32>
    %51 = arith.select %48, %46, %50 : vector<156x32xi1>, vector<156x32xf32>
    %52 = arith.truncf %51 : vector<156x32xf32> to vector<156x32xbf16>
    %c0_32 = arith.constant 0 : index
    %c0_33 = arith.constant 0 : index
    %53 = vector.load %arg7[%c0_32, %c0_33] : memref<160x32xbf16, #tpu.memory_space<vmem>>, vector<156x32xbf16>
    tpu.vector_store %arg7[%c0_32, %c0_33], %52 {strides = array<i32>} : memref<160x32xbf16, #tpu.memory_space<vmem>>, vector<156x32xbf16>,
    return
  }
  func.func @transform_0(%arg0: i32) -> (i32, i32) {
    %c0_i32 = arith.constant 0 : i32
    %c0_i32_0 = arith.constant 0 : i32
    return %arg0, %c0_i32 : i32, i32
  }
  func.func @transform_1(%arg0: i32) -> (i32, i32, i32) {
    %c0_i32 = arith.constant 0 : i32
    %c0_i32_0 = arith.constant 0 : i32
    %c0_i32_1 = arith.constant 0 : i32
    %c0_i32_2 = arith.constant 0 : i32
    return %c0_i32, %c0_i32_0, %c0_i32_1 : i32, i32, i32
  }
  func.func @transform_2(%arg0: i32) -> (i32, i32) {
    %c0_i32 = arith.constant 0 : i32
    %c0_i32_0 = arith.constant 0 : i32
    %c0_i32_1 = arith.constant 0 : i32
    return %c0_i32, %c0_i32_0 : i32, i32
  }
  func.func @transform_3(%arg0: i32) -> (i32, i32, i32) {
    %c0_i32 = arith.constant 0 : i32
    %c0_i32_0 = arith.constant 0 : i32
    %c0_i32_1 = arith.constant 0 : i32
    %c0_i32_2 = arith.constant 0 : i32
    return %c0_i32, %c0_i32_0, %c0_i32_1 : i32, i32, i32
  }
  func.func @transform_4(%arg0: i32) -> (i32, i32) {
    %c0_i32 = arith.constant 0 : i32
    %c0_i32_0 = arith.constant 0 : i32
    %c0_i32_1 = arith.constant 0 : i32
    return %c0_i32, %c0_i32_0 : i32, i32
  }
  func.func @transform_5(%arg0: i32) -> (i32, i32) {
    %c0_i32 = arith.constant 0 : i32
    %c0_i32_0 = arith.constant 0 : i32
    %c0_i32_1 = arith.constant 0 : i32
    return %c0_i32, %c0_i32_0 : i32, i32
  }
  func.func @transform_6(%arg0: i32) -> (i32, i32) {
    %c0_i32 = arith.constant 0 : i32
    %c0_i32_0 = arith.constant 0 : i32
    return %arg0, %c0_i32 : i32, i32
  }
}

</mosaic_0001>

<llo_original>
// kernel: tpu_custom_call.1
$region0: #{tpu_custom_call.1}
  #allocation0 [shape = 'u32[]', space=smem, size = 0x4, offset = 0x4, fixed_abs, tag = 'smem constant byte address 0x4 - core index']
  #allocation1 [shape = 'u32[144,128]{1,0:T(1,128)}', space=vmem, size = 0x12000, scoped, tag = 'internal scratch']
  %s0 = inlined_call_operand.vmem [shape: bf16[640,32], index: 0, kind: input, shape index: {}]
  %s1 = inlined_call_operand.vmem [shape: bf16[3,32,32], index: 1, kind: input, shape index: {}]
  %s2 = inlined_call_operand.vmem [shape: f32[1,32], index: 2, kind: input, shape index: {}]
  %s3 = inlined_call_operand.vmem [shape: bf16[3,32,32], index: 3, kind: input, shape index: {}]
  %s4 = inlined_call_operand.vmem [shape: f32[1,32], index: 4, kind: input, shape index: {}]
  %s5 = inlined_call_operand.vmem [shape: f32[158,1], index: 5, kind: input, shape index: {}]
  %s6 = inlined_call_operand.vmem [shape: bf16[640,32], index: 6, kind: output, shape index: {}]
  %s7 = sld [smem:[#allocation0]]
  $region57: #{tpu_custom_call.1} parent=0
    _
  %s9 = ssub.s32 1, %s7
  %s10 = scalar_select 0, %s9, %s7
  loop: start=0, step=1, limit=6
  $region2: #{tpu_custom_call.1} parent=0 // loop_pre_header
    _
  $region3: #{tpu_custom_call.1} parent=0 // loop_header
    %s12 = sphi 0, %s16
    %p13 = scmp.ge.s32.totalorder %s12, 6
    %s22 = sphi 0, %s24
    %s25 = sphi 0, %s22
    %s26 = sphi 0, %s25
    %s42 = sphi 0, %s26
    %s46 = sphi 0, %s46
    %s48 = sphi 0, %s46
    %s49 = sphi 0, %s48
    %s63 = sphi 0, %s49
    %s67 = sphi 0, %s67
    %s69 = sphi 0, %s67
    %s70 = sphi 0, %s69
    %s84 = sphi 0, %s70
    %s88 = sphi 0, %s88
    %s90 = sphi 0, %s88
    %s91 = sphi 0, %s90
    %s105 = sphi 0, %s91
    %s109 = sphi 0, %s109
    %s111 = sphi 0, %s109
    %s112 = sphi 0, %s111
    %s126 = sphi 0, %s112
    %s130 = sphi 0, %s130
    %s132 = sphi 0, %s130
    %s133 = sphi 0, %s132
    %s147 = sphi 0, %s133
    %s153 = sphi 0, %s155
    %s156 = sphi 0, %s153
    %s157 = sphi 0, %s156
    %s173 = sphi 0, %s157
  $region4: #{tpu_custom_call.1} parent=0 // loop_header_branch
    %15 = sbr.rel (%p13) target = $region8
  $region5: #{tpu_custom_call.1} parent=0 // loop_body
    %s17 = ssub.s32 %s12, 1
    %s18 = ssub.s32 %s12, 2
    %s19 = sadd.s32 %s12, 1
    %s20 = ssub.s32 %s12, %s19
    %p21 = scmp.eq.s32.totalorder %s20, 0
    %s23 = sadd.s32 %s22, 1
    %s24 = scalar_select %p21, %s22, %s23
    %p27 = pneg %p21
    %p28 = scmp.eq.s32.totalorder %s12, 3
    %p29 = por %p27, %p28
    %p30 = scmp.ne.s32.totalorder %s22, %s25
    %p31 = scmp.eq.s32.totalorder %s12, 0
    %p32 = por %p30, %p31
    %p33 = scmp.ne.s32.totalorder %s22, %s25
    %p34 = scmp.eq.s32.totalorder %s17, 3
    %p35 = por %p33, %p34
    %p36 = scmp.ne.s32.totalorder %s25, %s26
    %p37 = scmp.eq.s32.totalorder %s17, 0
    %p38 = por %p36, %p37
    %p39 = scmp.ne.s32.totalorder %s25, %s26
    %p40 = scmp.eq.s32.totalorder %s18, 3
    %p41 = por %p39, %p40
    %p43 = scmp.ne.s32.totalorder %s26, %s42
    %p44 = scmp.eq.s32.totalorder %s18, 0
    %p45 = por %p43, %p44
    %s47 = sadd.s32 %s46, 1
    %p50 = scmp.eq.s32.totalorder %s12, 3
    %p51 = scmp.ne.s32.totalorder %s46, %s48
    %p52 = scmp.eq.s32.totalorder %s12, 0
    %p53 = por %p51, %p52
    %p54 = scmp.ne.s32.totalorder %s46, %s48
    %p55 = scmp.eq.s32.totalorder %s17, 3
    %p56 = por %p54, %p55
    %p57 = scmp.ne.s32.totalorder %s48, %s49
    %p58 = scmp.eq.s32.totalorder %s17, 0
    %p59 = por %p57, %p58
    %p60 = scmp.ne.s32.totalorder %s48, %s49
    %p61 = scmp.eq.s32.totalorder %s18, 3
    %p62 = por %p60, %p61
    %p64 = scmp.ne.s32.totalorder %s49, %s63
    %p65 = scmp.eq.s32.totalorder %s18, 0
    %p66 = por %p64, %p65
    %s68 = sadd.s32 %s67, 1
    %p71 = scmp.eq.s32.totalorder %s12, 3
    %p72 = scmp.ne.s32.totalorder %s67, %s69
    %p73 = scmp.eq.s32.totalorder %s12, 0
    %p74 = por %p72, %p73
    %p75 = scmp.ne.s32.totalorder %s67, %s69
    %p76 = scmp.eq.s32.totalorder %s17, 3
    %p77 = por %p75, %p76
    %p78 = scmp.ne.s32.totalorder %s69, %s70
    %p79 = scmp.eq.s32.totalorder %s17, 0
    %p80 = por %p78, %p79
    %p81 = scmp.ne.s32.totalorder %s69, %s70
    %p82 = scmp.eq.s32.totalorder %s18, 3
    %p83 = por %p81, %p82
    %p85 = scmp.ne.s32.totalorder %s70, %s84
    %p86 = scmp.eq.s32.totalorder %s18, 0
    %p87 = por %p85, %p86
    %s89 = sadd.s32 %s88, 1
    %p92 = scmp.eq.s32.totalorder %s12, 3
    %p93 = scmp.ne.s32.totalorder %s88, %s90
    %p94 = scmp.eq.s32.totalorder %s12, 0
    %p95 = por %p93, %p94
    %p96 = scmp.ne.s32.totalorder %s88, %s90
    %p97 = scmp.eq.s32.totalorder %s17, 3
    %p98 = por %p96, %p97
    %p99 = scmp.ne.s32.totalorder %s90, %s91
    %p100 = scmp.eq.s32.totalorder %s17, 0
    %p101 = por %p99, %p100
    %p102 = scmp.ne.s32.totalorder %s90, %s91
    %p103 = scmp.eq.s32.totalorder %s18, 3
    %p104 = por %p102, %p103
    %p106 = scmp.ne.s32.totalorder %s91, %s105
    %p107 = scmp.eq.s32.totalorder %s18, 0
    %p108 = por %p106, %p107
    %s110 = sadd.s32 %s109, 1
    %p113 = scmp.eq.s32.totalorder %s12, 3
    %p114 = scmp.ne.s32.totalorder %s109, %s111
    %p115 = scmp.eq.s32.totalorder %s12, 0
    %p116 = por %p114, %p115
    %p117 = scmp.ne.s32.totalorder %s109, %s111
    %p118 = scmp.eq.s32.totalorder %s17, 3
    %p119 = por %p117, %p118
    %p120 = scmp.ne.s32.totalorder %s111, %s112
    %p121 = scmp.eq.s32.totalorder %s17, 0
    %p122 = por %p120, %p121
    %p123 = scmp.ne.s32.totalorder %s111, %s112
    %p124 = scmp.eq.s32.totalorder %s18, 3
    %p125 = por %p123, %p124
    %p127 = scmp.ne.s32.totalorder %s112, %s126
    %p128 = scmp.eq.s32.totalorder %s18, 0
    %p129 = por %p127, %p128
    %s131 = sadd.s32 %s130, 1
    %p134 = scmp.eq.s32.totalorder %s12, 3
    %p135 = scmp.ne.s32.totalorder %s130, %s132
    %p136 = scmp.eq.s32.totalorder %s12, 0
    %p137 = por %p135, %p136
    %p138 = scmp.ne.s32.totalorder %s130, %s132
    %p139 = scmp.eq.s32.totalorder %s17, 3
    %p140 = por %p138, %p139
    %p141 = scmp.ne.s32.totalorder %s132, %s133
    %p142 = scmp.eq.s32.totalorder %s17, 0
    %p143 = por %p141, %p142
    %p144 = scmp.ne.s32.totalorder %s132, %s133
    %p145 = scmp.eq.s32.totalorder %s18, 3
    %p146 = por %p144, %p145
    %p148 = scmp.ne.s32.totalorder %s133, %s147
    %p149 = scmp.eq.s32.totalorder %s18, 0
    %p150 = por %p148, %p149
    %s151 = ssub.s32 %s12, %s19
    %p152 = scmp.eq.s32.totalorder %s151, 0
    %s154 = sadd.s32 %s153, 1
    %s155 = scalar_select %p152, %s153, %s154
    %p158 = pneg %p152
    %p159 = scmp.eq.s32.totalorder %s12, 3
    %p160 = por %p158, %p159
    %p161 = scmp.ne.s32.totalorder %s153, %s156
    %p162 = scmp.eq.s32.totalorder %s12, 0
    %p163 = por %p161, %p162
    %p164 = scmp.ne.s32.totalorder %s153, %s156
    %p165 = scmp.eq.s32.totalorder %s17, 3
    %p166 = por %p164, %p165
    %p167 = scmp.ne.s32.totalorder %s156, %s157
    %p168 = scmp.eq.s32.totalorder %s17, 0
    %p169 = por %p167, %p168
    %p170 = scmp.ne.s32.totalorder %s156, %s157
    %p171 = scmp.eq.s32.totalorder %s18, 3
    %p172 = por %p170, %p171
    %p174 = scmp.ne.s32.totalorder %s157, %s173
    %p175 = scmp.eq.s32.totalorder %s18, 0
    %p176 = por %p174, %p175
    %p177 = scmp.le.s32.totalorder 1, %s12
    %p178 = scmp.lt.s32.totalorder %s12, 5
    %p179 = pnand %p177, %p178
    %p180 = pneg %p179
    // Predicated region
    $region9: #{tpu_custom_call.1} parent=5 // pred_check
      _
    $region10: #{tpu_custom_call.1} parent=5 // pred_check_branch
      %182 = sbr.rel (%p179) target = $region12
    $region11: #{tpu_custom_call.1} parent=5 // pred_region
      %s183 = ssub.s32 %s12, 1
      // Predicated region
      $region13: #{tpu_custom_call.1} parent=11 // pred_check
        %p184 = pneg %p59
      $region14: #{tpu_custom_call.1} parent=11 // pred_check_branch
        %186 = sbr.rel (%p184) target = $region16
      $region15: #{tpu_custom_call.1} parent=11 // pred_region
        _
      $region16: #{tpu_custom_call.1} parent=11 // pred_fallthru
        _
      // Predicated region
      $region17: #{tpu_custom_call.1} parent=11 // pred_check
        %p187 = pneg %p80
      $region18: #{tpu_custom_call.1} parent=11 // pred_check_branch
        %189 = sbr.rel (%p187) target = $region20
      $region19: #{tpu_custom_call.1} parent=11 // pred_region
        _
      $region20: #{tpu_custom_call.1} parent=11 // pred_fallthru
        _
      // Predicated region
      $region21: #{tpu_custom_call.1} parent=11 // pred_check
        %p190 = pneg %p101
      $region22: #{tpu_custom_call.1} parent=11 // pred_check_branch
        %192 = sbr.rel (%p190) target = $region24
      $region23: #{tpu_custom_call.1} parent=11 // pred_region
        _
      $region24: #{tpu_custom_call.1} parent=11 // pred_fallthru
        _
      // Predicated region
      $region25: #{tpu_custom_call.1} parent=11 // pred_check
        %p193 = pneg %p122
      $region26: #{tpu_custom_call.1} parent=11 // pred_check_branch
        %195 = sbr.rel (%p193) target = $region28
      $region27: #{tpu_custom_call.1} parent=11 // pred_region
        _
      $region28: #{tpu_custom_call.1} parent=11 // pred_fallthru
        _
      // Predicated region
      $region29: #{tpu_custom_call.1} parent=11 // pred_check
        %p196 = pneg %p143
      $region30: #{tpu_custom_call.1} parent=11 // pred_check_branch
        %198 = sbr.rel (%p196) target = $region32
      $region31: #{tpu_custom_call.1} parent=11 // pred_region
        _
      $region32: #{tpu_custom_call.1} parent=11 // pred_fallthru
        _
    $region12: #{tpu_custom_call.1} parent=5 // pred_fallthru
      _
    %p199 = scmp.lt.s32.totalorder %s12, 4
    // Predicated region
    $region33: #{tpu_custom_call.1} parent=5 // pred_check
      %p200 = pneg %p199
    $region34: #{tpu_custom_call.1} parent=5 // pred_check_branch
      %202 = sbr.rel (%p200) target = $region36
    $region35: #{tpu_custom_call.1} parent=5 // pred_region
      // Predicated region
      $region37: #{tpu_custom_call.1} parent=35 // pred_check
        %p203 = pneg %p32
      $region38: #{tpu_custom_call.1} parent=35 // pred_check_branch
        %205 = sbr.rel (%p203) target = $region40
      $region39: #{tpu_custom_call.1} parent=35 // pred_region
        %s206 = smul.u32 20, %s12
        %p207 = scmp.lt.s32.totalorder %s206, 79
        %s208 = scalar_select %p207, %s206, 79
        %s209 = smul.addr %s208, 4
        %s210 = scalar_lea.vmem %s0, %s209
        %s211 = smul.u32 20, %s12
      $region40: #{tpu_custom_call.1} parent=35 // pred_fallthru
        _
    $region36: #{tpu_custom_call.1} parent=5 // pred_fallthru
      _
    %p212 = scmp.le.s32.totalorder 1, %s12
    %p213 = scmp.lt.s32.totalorder %s12, 5
    %p214 = pnand %p212, %p213
    %p215 = pneg %p214
    // Predicated region
    $region41: #{tpu_custom_call.1} parent=5 // pred_check
      _
    $region42: #{tpu_custom_call.1} parent=5 // pred_check_branch
      %217 = sbr.rel (%p214) target = $region44
    $region43: #{tpu_custom_call.1} parent=5 // pred_region
      %s218 = ssub.s32 %s12, 1
      %s219 = smul.u32 20, %s17
      %p220 = scmp.lt.s32.totalorder %s219, 79
      %s221 = scalar_select %p220, %s219, 79
      %s222 = smul.addr %s221, 4
      %s223 = scalar_lea.vmem %s0, %s222
      %p224 = pneg %p38
      %p225 = pneg %p35
      %p226 = pneg %p59
      %p227 = pneg %p56
      %p228 = pneg %p80
      %p229 = pneg %p77
      %p230 = pneg %p101
      %p231 = pneg %p98
      %p232 = pneg %p122
      %p233 = pneg %p119
      %p234 = pneg %p143
      %p235 = pneg %p140
      %p236 = pneg %p169
      %p237 = pneg %p166
      %s238 = smul.u32 20, %s17
      %p239 = scmp.lt.s32.totalorder %s238, 79
      %s240 = scalar_select %p239, %s238, 79
      %s241 = smul.addr %s240, 4
      %s242 = scalar_lea.vmem %s6, %s241
      %s243 = smul.u32 20, %s17
      %p244 = scmp.lt.s32.totalorder %s243, 79
      %s245 = scalar_select %p244, %s243, 79
      %s246 = smul.addr %s245, 4
      %s247 = scalar_lea.vmem %s0, %s246
      %s248 = smul.u32 20, %s17
      %s249 = smul.u32 20, %s17
      %p250 = scmp.lt.s32.totalorder %s249, 79
      %s251 = scalar_select %p250, %s249, 79
      %s252 = smul.addr %s251, 4
      %s253 = scalar_lea.vmem %s6, %s252
      %s254 = smul.u32 20, %s17
      %v256 = vld [vmem:[%s247] sm:$0xf]
      %v257 = vld [vmem:[%s247 + $0x4] sm:$0xf]
      %v258 = vld [vmem:[%s247 + $0x8] sm:$0xf]
      %v259 = vld [vmem:[%s247 + $0xc] sm:$0xf]
      %v260 = vld [vmem:[%s247 + $0x10] sm:$0xf]
      %v261 = vld [vmem:[%s247 + $0x14] sm:$0xf]
      %v262 = vld [vmem:[%s247 + $0x18] sm:$0xf]
      %v263 = vld [vmem:[%s247 + $0x1c] sm:$0xf]
      %v264 = vld [vmem:[%s247 + $0x20] sm:$0xf]
      %v265 = vld [vmem:[%s247 + $0x24] sm:$0xf]
      %v266 = vld [vmem:[%s247 + $0x28] sm:$0xf]
      %v267 = vld [vmem:[%s247 + $0x2c] sm:$0xf]
      %v268 = vld [vmem:[%s247 + $0x30] sm:$0xf]
      %v269 = vld [vmem:[%s247 + $0x34] sm:$0xf]
      %v270 = vld [vmem:[%s247 + $0x38] sm:$0xf]
      %v271 = vld [vmem:[%s247 + $0x3c] sm:$0xf]
      %v272 = vld [vmem:[%s247 + $0x40] sm:$0xf]
      %v273 = vld [vmem:[%s247 + $0x44] sm:$0xf]
      %v274 = vld [vmem:[%s247 + $0x48] sm:$0xf]
      %v275 = vld [vmem:[%s247 + $0x4c] sm:$0xf]
      %v276 = vld [vmem:[%s1] sm:$0xf]
      %v277 = vld [vmem:[%s1 + $0x4] sm:$0xf]
      %v278 = vld [vmem:[%s1 + $0x8] sm:$0xf]
      %v279 = vld [vmem:[%s1 + $0xc] sm:$0xf]
      %s280 = scalar_lea.vmem %s1, 16
      %v281 = vld [vmem:[%s280] sm:$0xf]
      %v282 = vld [vmem:[%s280 + $0x4] sm:$0xf]
      %v283 = vld [vmem:[%s280 + $0x8] sm:$0xf]
      %v284 = vld [vmem:[%s280 + $0xc] sm:$0xf]
      %v305 = vunpack.c.l.b16 %v256
      %v306 = vunpack.c.l.b16 %v257
      %v307 = vunpack.c.l.b16 %v258
      %v308 = vunpack.c.l.b16 %v259
      %v309 = vunpack.c.l.b16 %v260
      %v310 = vunpack.c.l.b16 %v261
      %v311 = vunpack.c.l.b16 %v262
      %v312 = vunpack.c.l.b16 %v263
      %v313 = vunpack.c.l.b16 %v264
      %v314 = vunpack.c.l.b16 %v265
      %v315 = vunpack.c.l.b16 %v266
      %v316 = vunpack.c.l.b16 %v267
      %v317 = vunpack.c.l.b16 %v268
      %v318 = vunpack.c.l.b16 %v269
      %v319 = vunpack.c.l.b16 %v270
      %v320 = vunpack.c.l.b16 %v271
      %v321 = vunpack.c.l.b16 %v272
      %v322 = vunpack.c.l.b16 %v273
      %v323 = vunpack.c.l.b16 %v274
      %v324 = vunpack.c.l.b16 %v275
      %v325 = vpack.c.b16 %v306, %v305
      %v326 = vpack.c.b16 %v308, %v307
      %v327 = vpack.c.b16 %v310, %v309
      %v328 = vpack.c.b16 %v312, %v311
      %v329 = vpack.c.b16 %v314, %v313
      %v330 = vpack.c.b16 %v316, %v315
      %v331 = vpack.c.b16 %v318, %v317
      %v332 = vpack.c.b16 %v320, %v319
      %v333 = vpack.c.b16 %v322, %v321
      %v334 = vpack.c.b16 %v324, %v323
      %vm335 = vsmask.f32 7424
      %v337 = vshrl.u32 %v325, 16
      %v339 = vshll.u32 %v325, 16
      %v341 = vrot.slane %v339, 1
      %v342 = vor.u32 %v337, %v341
      %v344 = vshll.u32 %v326, 16
      %v346 = vrot.slane %v344, 1
      %v347 = vsel %vm335, %v342, %v346
      %v348 = vshrl.u32 %v326, 16
      %v350 = vor.u32 %v348, %v346
      %v352 = vshll.u32 %v327, 16
      %v354 = vrot.slane %v352, 1
      %v355 = vsel %vm335, %v350, %v354
      %v356 = vshrl.u32 %v327, 16
      %v358 = vor.u32 %v356, %v354
      %v360 = vshll.u32 %v328, 16
      %v362 = vrot.slane %v360, 1
      %v363 = vsel %vm335, %v358, %v362
      %v364 = vshrl.u32 %v328, 16
      %v366 = vor.u32 %v364, %v362
      %v368 = vshll.u32 %v329, 16
      %v370 = vrot.slane %v368, 1
      %v371 = vsel %vm335, %v366, %v370
      %v372 = vshrl.u32 %v329, 16
      %v374 = vor.u32 %v372, %v370
      %v376 = vshll.u32 %v330, 16
      %v378 = vrot.slane %v376, 1
      %v379 = vsel %vm335, %v374, %v378
      %v380 = vshrl.u32 %v330, 16
      %v382 = vor.u32 %v380, %v378
      %v384 = vshll.u32 %v331, 16
      %v386 = vrot.slane %v384, 1
      %v387 = vsel %vm335, %v382, %v386
      %v388 = vshrl.u32 %v331, 16
      %v390 = vor.u32 %v388, %v386
      %v392 = vshll.u32 %v332, 16
      %v394 = vrot.slane %v392, 1
      %v395 = vsel %vm335, %v390, %v394
      %v396 = vshrl.u32 %v332, 16
      %v398 = vor.u32 %v396, %v394
      %v400 = vshll.u32 %v333, 16
      %v402 = vrot.slane %v400, 1
      %v403 = vsel %vm335, %v398, %v402
      %v404 = vshrl.u32 %v333, 16
      %v406 = vor.u32 %v404, %v402
      %v408 = vshll.u32 %v334, 16
      %v410 = vrot.slane %v408, 1
      %v411 = vsel %vm335, %v406, %v410
      %v412 = vshrl.u32 %v334, 16
      %v414 = vor.u32 %v412, %v410
      %v419 = vunpack.c.l.b16 %v281
      %v420 = vunpack.c.l.b16 %v282
      %v421 = vunpack.c.l.b16 %v283
      %v422 = vunpack.c.l.b16 %v284
      %v423 = vpack.c.b16 %v420, %v419
      %v424 = vpack.c.b16 %v422, %v421
      %vm427 = vcmask 261120
      %v429 = vsel %vm427, %v347, 0
      %v432 = vsel %vm427, %v355, 0
      %v435 = vsel %vm427, %v363, 0
      %v438 = vsel %vm427, %v371, 0
      %v441 = vsel %vm427, %v379, 0
      %v444 = vsel %vm427, %v387, 0
      %v447 = vsel %vm427, %v395, 0
      %v450 = vsel %vm427, %v403, 0
      %v453 = vsel %vm427, %v411, 0
      %v456 = vsel %vm427, %v414, 0
      %458 = vmatprep.subr.bf16.mxu0 0
      %459 = vmatpush1.bf16.msra.mxu0 0
      %460 = vmatprep.subr.bf16.mxu0 0
      %461 = vmatpush1.bf16.msra.mxu0 0
      %462 = vmatprep.subr.bf16.mxu0 0
      %463 = vmatpush1.bf16.msra.mxu0 0
      %464 = vmatprep.subr.bf16.mxu0 0
      %465 = vmatpush1.bf16.msra.mxu0 0
      %466 = vmatprep.subr.bf16.mxu0 0
      %467 = vmatpush1.bf16.msra.mxu0 0
      %468 = vmatprep.subr.bf16.mxu0 0
      %469 = vmatpush1.bf16.msra.mxu0 0
      %470 = vmatprep.subr.bf16.mxu0 0
      %471 = vmatpush1.bf16.msra.mxu0 %v424
      %472 = vmatprep.subr.bf16.mxu0 0
      %473 = vmatpush1.bf16.msra.mxu0 %v423
      %474 = vmatprep.subr.bf16.mxu0 0
      %475 = vmatpush2.bf16.msra.mxu0 0
      %476 = vmatprep.subr.bf16.mxu0 0
      %477 = vmatpush2.bf16.msra.mxu0 0
      %478 = vmatprep.subr.bf16.mxu0 0
      %479 = vmatpush2.bf16.msra.mxu0 0
      %480 = vmatprep.subr.bf16.mxu0 0
      %481 = vmatpush2.bf16.msra.mxu0 0
      %482 = vmatprep.subr.bf16.mxu0 0
      %483 = vmatpush2.bf16.msra.mxu0 0
      %484 = vmatprep.subr.bf16.mxu0 0
      %485 = vmatpush2.bf16.msra.mxu0 0
      %486 = vmatprep.subr.bf16.mxu0 0
      %487 = vmatpush2.bf16.msra.mxu0 0
      %488 = vmatprep.subr.bf16.mxu0 0
      %489 = vmatpush2.bf16.msra.mxu0 0
      %490 = vmatprep.mubr.bf16.mxu0 0
      %491 = vmatmul.mubr.bf16.gmra.mxu0 %v429
      %v492 = vpop.f32.mrf.mxu0
      %v493 = vadd.f32 0.0, %v492
      %v494 = vpop.f32.mrf.mxu0
      %v495 = vpop.f32.mrf.mxu0
      %v496 = vadd.f32 0.0, %v495
      %v497 = vpop.f32.mrf.mxu0
      %498 = vmatprep.mubr.bf16.mxu0 0
      %499 = vmatmul.mubr.bf16.gmra.mxu0 %v432
      %v500 = vpop.f32.mrf.mxu0
      %v501 = vadd.f32 0.0, %v500
      %v502 = vpop.f32.mrf.mxu0
      %v503 = vpop.f32.mrf.mxu0
      %v504 = vadd.f32 0.0, %v503
      %v505 = vpop.f32.mrf.mxu0
      %506 = vmatprep.mubr.bf16.mxu0 0
      %507 = vmatmul.mubr.bf16.gmra.mxu0 %v435
      %v508 = vpop.f32.mrf.mxu0
      %v509 = vadd.f32 0.0, %v508
      %v510 = vpop.f32.mrf.mxu0
      %v511 = vpop.f32.mrf.mxu0
      %v512 = vadd.f32 0.0, %v511
      %v513 = vpop.f32.mrf.mxu0
      %514 = vmatprep.mubr.bf16.mxu0 0
      %515 = vmatmul.mubr.bf16.gmra.mxu0 %v438
      %v516 = vpop.f32.mrf.mxu0
      %v517 = vadd.f32 0.0, %v516
      %v518 = vpop.f32.mrf.mxu0
      %v519 = vpop.f32.mrf.mxu0
      %v520 = vadd.f32 0.0, %v519
      %v521 = vpop.f32.mrf.mxu0
      %522 = vmatprep.mubr.bf16.mxu0 0
      %523 = vmatmul.mubr.bf16.gmra.mxu0 %v441
      %v524 = vpop.f32.mrf.mxu0
      %v525 = vadd.f32 0.0, %v524
      %v526 = vpop.f32.mrf.mxu0
      %v527 = vpop.f32.mrf.mxu0
      %v528 = vadd.f32 0.0, %v527
      %v529 = vpop.f32.mrf.mxu0
      %530 = vmatprep.mubr.bf16.mxu0 0
      %531 = vmatmul.mubr.bf16.gmra.mxu0 %v444
      %v532 = vpop.f32.mrf.mxu0
      %v533 = vadd.f32 0.0, %v532
      %v534 = vpop.f32.mrf.mxu0
      %v535 = vpop.f32.mrf.mxu0
      %v536 = vadd.f32 0.0, %v535
      %v537 = vpop.f32.mrf.mxu0
      %538 = vmatprep.mubr.bf16.mxu0 0
      %539 = vmatmul.mubr.bf16.gmra.mxu0 %v447
      %v540 = vpop.f32.mrf.mxu0
      %v541 = vadd.f32 0.0, %v540
      %v542 = vpop.f32.mrf.mxu0
      %v543 = vpop.f32.mrf.mxu0
      %v544 = vadd.f32 0.0, %v543
      %v545 = vpop.f32.mrf.mxu0
      %546 = vmatprep.mubr.bf16.mxu0 0
      %547 = vmatmul.mubr.bf16.gmra.mxu0 %v450
      %v548 = vpop.f32.mrf.mxu0
      %v549 = vadd.f32 0.0, %v548
      %v550 = vpop.f32.mrf.mxu0
      %v551 = vpop.f32.mrf.mxu0
      %v552 = vadd.f32 0.0, %v551
      %v553 = vpop.f32.mrf.mxu0
      %554 = vmatprep.mubr.bf16.mxu0 0
      %555 = vmatmul.mubr.bf16.gmra.mxu0 %v453
      %v556 = vpop.f32.mrf.mxu0
      %v557 = vadd.f32 0.0, %v556
      %v558 = vpop.f32.mrf.mxu0
      %v559 = vpop.f32.mrf.mxu0
      %v560 = vadd.f32 0.0, %v559
      %v561 = vpop.f32.mrf.mxu0
      %562 = vmatprep.mubr.bf16.mxu0 0
      %563 = vmatmul.mubr.bf16.gmra.mxu0 %v456
      %v564 = vpop.f32.mrf.mxu0
      %v565 = vadd.f32 0.0, %v564
      %v566 = vpop.f32.mrf.mxu0
      %v567 = vpop.f32.mrf.mxu0
      %v568 = vadd.f32 0.0, %v567
      %v569 = vpop.f32.mrf.mxu0
      %570 = vdwg.mxu0
      %v575 = vunpack.c.l.b16 %v276
      %v576 = vunpack.c.l.b16 %v277
      %v577 = vunpack.c.l.b16 %v278
      %v578 = vunpack.c.l.b16 %v279
      %v579 = vpack.c.b16 %v576, %v575
      %v580 = vpack.c.b16 %v578, %v577
      %v583 = vsel %vm427, %v325, 0
      %v585 = vsel %vm427, %v326, 0
      %v587 = vsel %vm427, %v327, 0
      %v589 = vsel %vm427, %v328, 0
      %v591 = vsel %vm427, %v329, 0
      %v593 = vsel %vm427, %v330, 0
      %v595 = vsel %vm427, %v331, 0
      %v597 = vsel %vm427, %v332, 0
      %v599 = vsel %vm427, %v333, 0
      %v601 = vsel %vm427, %v334, 0
      %603 = vmatprep.subr.bf16.mxu0 0
      %604 = vmatpush1.bf16.msra.mxu0 0
      %605 = vmatprep.subr.bf16.mxu0 0
      %606 = vmatpush1.bf16.msra.mxu0 0
      %607 = vmatprep.subr.bf16.mxu0 0
      %608 = vmatpush1.bf16.msra.mxu0 0
      %609 = vmatprep.subr.bf16.mxu0 0
      %610 = vmatpush1.bf16.msra.mxu0 0
      %611 = vmatprep.subr.bf16.mxu0 0
      %612 = vmatpush1.bf16.msra.mxu0 0
      %613 = vmatprep.subr.bf16.mxu0 0
      %614 = vmatpush1.bf16.msra.mxu0 0
      %615 = vmatprep.subr.bf16.mxu0 0
      %616 = vmatpush1.bf16.msra.mxu0 %v580
      %617 = vmatprep.subr.bf16.mxu0 0
      %618 = vmatpush1.bf16.msra.mxu0 %v579
      %619 = vmatprep.subr.bf16.mxu0 0
      %620 = vmatpush2.bf16.msra.mxu0 0
      %621 = vmatprep.subr.bf16.mxu0 0
      %622 = vmatpush2.bf16.msra.mxu0 0
      %623 = vmatprep.subr.bf16.mxu0 0
      %624 = vmatpush2.bf16.msra.mxu0 0
      %625 = vmatprep.subr.bf16.mxu0 0
      %626 = vmatpush2.bf16.msra.mxu0 0
      %627 = vmatprep.subr.bf16.mxu0 0
      %628 = vmatpush2.bf16.msra.mxu0 0
      %629 = vmatprep.subr.bf16.mxu0 0
      %630 = vmatpush2.bf16.msra.mxu0 0
      %631 = vmatprep.subr.bf16.mxu0 0
      %632 = vmatpush2.bf16.msra.mxu0 0
      %633 = vmatprep.subr.bf16.mxu0 0
      %634 = vmatpush2.bf16.msra.mxu0 0
      %635 = vmatprep.mubr.bf16.mxu0 0
      %636 = vmatmul.mubr.bf16.gmra.mxu0 %v583
      %v637 = vpop.f32.mrf.mxu0
      %v638 = vadd.f32 %v493, %v637
      %v639 = vpop.f32.mrf.mxu0
      %v640 = vpop.f32.mrf.mxu0
      %v641 = vadd.f32 %v496, %v640
      %v642 = vpop.f32.mrf.mxu0
      %643 = vmatprep.mubr.bf16.mxu0 0
      %644 = vmatmul.mubr.bf16.gmra.mxu0 %v585
      %v645 = vpop.f32.mrf.mxu0
      %v646 = vadd.f32 %v501, %v645
      %v647 = vpop.f32.mrf.mxu0
      %v648 = vpop.f32.mrf.mxu0
      %v649 = vadd.f32 %v504, %v648
      %v650 = vpop.f32.mrf.mxu0
      %651 = vmatprep.mubr.bf16.mxu0 0
      %652 = vmatmul.mubr.bf16.gmra.mxu0 %v587
      %v653 = vpop.f32.mrf.mxu0
      %v654 = vadd.f32 %v509, %v653
      %v655 = vpop.f32.mrf.mxu0
      %v656 = vpop.f32.mrf.mxu0
      %v657 = vadd.f32 %v512, %v656
      %v658 = vpop.f32.mrf.mxu0
      %659 = vmatprep.mubr.bf16.mxu0 0
      %660 = vmatmul.mubr.bf16.gmra.mxu0 %v589
      %v661 = vpop.f32.mrf.mxu0
      %v662 = vadd.f32 %v517, %v661
      %v663 = vpop.f32.mrf.mxu0
      %v664 = vpop.f32.mrf.mxu0
      %v665 = vadd.f32 %v520, %v664
      %v666 = vpop.f32.mrf.mxu0
      %667 = vmatprep.mubr.bf16.mxu0 0
      %668 = vmatmul.mubr.bf16.gmra.mxu0 %v591
      %v669 = vpop.f32.mrf.mxu0
      %v670 = vadd.f32 %v525, %v669
      %v671 = vpop.f32.mrf.mxu0
      %v672 = vpop.f32.mrf.mxu0
      %v673 = vadd.f32 %v528, %v672
      %v674 = vpop.f32.mrf.mxu0
      %675 = vmatprep.mubr.bf16.mxu0 0
      %676 = vmatmul.mubr.bf16.gmra.mxu0 %v593
      %v677 = vpop.f32.mrf.mxu0
      %v678 = vadd.f32 %v533, %v677
      %v679 = vpop.f32.mrf.mxu0
      %v680 = vpop.f32.mrf.mxu0
      %v681 = vadd.f32 %v536, %v680
      %v682 = vpop.f32.mrf.mxu0
      %683 = vmatprep.mubr.bf16.mxu0 0
      %684 = vmatmul.mubr.bf16.gmra.mxu0 %v595
      %v685 = vpop.f32.mrf.mxu0
      %v686 = vadd.f32 %v541, %v685
      %v687 = vpop.f32.mrf.mxu0
      %v688 = vpop.f32.mrf.mxu0
      %v689 = vadd.f32 %v544, %v688
      %v690 = vpop.f32.mrf.mxu0
      %691 = vmatprep.mubr.bf16.mxu0 0
      %692 = vmatmul.mubr.bf16.gmra.mxu0 %v597
      %v693 = vpop.f32.mrf.mxu0
      %v694 = vadd.f32 %v549, %v693
      %v695 = vpop.f32.mrf.mxu0
      %v696 = vpop.f32.mrf.mxu0
      %v697 = vadd.f32 %v552, %v696
      %v698 = vpop.f32.mrf.mxu0
      %699 = vmatprep.mubr.bf16.mxu0 0
      %700 = vmatmul.mubr.bf16.gmra.mxu0 %v599
      %v701 = vpop.f32.mrf.mxu0
      %v702 = vadd.f32 %v557, %v701
      %v703 = vpop.f32.mrf.mxu0
      %v704 = vpop.f32.mrf.mxu0
      %v705 = vadd.f32 %v560, %v704
      %v706 = vpop.f32.mrf.mxu0
      %707 = vmatprep.mubr.bf16.mxu0 0
      %708 = vmatmul.mubr.bf16.gmra.mxu0 %v601
      %v709 = vpop.f32.mrf.mxu0
      %v710 = vadd.f32 %v565, %v709
      %v711 = vpop.f32.mrf.mxu0
      %v712 = vpop.f32.mrf.mxu0
      %v713 = vadd.f32 %v568, %v712
      %v714 = vpop.f32.mrf.mxu0
      %715 = vdwg.mxu0
      %s716 = scalar_lea.vmem %s1, 32
      %v717 = vld [vmem:[%s716] sm:$0xf]
      %v718 = vld [vmem:[%s716 + $0x4] sm:$0xf]
      %v719 = vld [vmem:[%s716 + $0x8] sm:$0xf]
      %v720 = vld [vmem:[%s716 + $0xc] sm:$0xf]
      %vm721 = vcmask 1046528
      %v722 = vrot.slane %v325, 1
      %v723 = vrot.slane %v326, 1
      %v724 = vsel %vm721, %v722, %v723
      %v725 = vrot.slane %v327, 1
      %v726 = vsel %vm721, %v723, %v725
      %v727 = vrot.slane %v328, 1
      %v728 = vsel %vm721, %v725, %v727
      %v729 = vrot.slane %v329, 1
      %v730 = vsel %vm721, %v727, %v729
      %v731 = vrot.slane %v330, 1
      %v732 = vsel %vm721, %v729, %v731
      %v733 = vrot.slane %v331, 1
      %v734 = vsel %vm721, %v731, %v733
      %v735 = vrot.slane %v332, 1
      %v736 = vsel %vm721, %v733, %v735
      %v737 = vrot.slane %v333, 1
      %v738 = vsel %vm721, %v735, %v737
      %v739 = vrot.slane %v334, 1
      %v740 = vsel %vm721, %v737, %v739
      %v745 = vunpack.c.l.b16 %v717
      %v746 = vunpack.c.l.b16 %v718
      %v747 = vunpack.c.l.b16 %v719
      %v748 = vunpack.c.l.b16 %v720
      %v749 = vpack.c.b16 %v746, %v745
      %v750 = vpack.c.b16 %v748, %v747
      %v754 = vsel %vm427, %v724, 0
      %v757 = vsel %vm427, %v726, 0
      %v760 = vsel %vm427, %v728, 0
      %v763 = vsel %vm427, %v730, 0
      %v766 = vsel %vm427, %v732, 0
      %v769 = vsel %vm427, %v734, 0
      %v772 = vsel %vm427, %v736, 0
      %v775 = vsel %vm427, %v738, 0
      %v778 = vsel %vm427, %v740, 0
      %v781 = vsel %vm427, %v739, 0
      %783 = vmatprep.subr.bf16.mxu0 0
      %784 = vmatpush1.bf16.msra.mxu0 0
      %785 = vmatprep.subr.bf16.mxu0 0
      %786 = vmatpush1.bf16.msra.mxu0 0
      %787 = vmatprep.subr.bf16.mxu0 0
      %788 = vmatpush1.bf16.msra.mxu0 0
      %789 = vmatprep.subr.bf16.mxu0 0
      %790 = vmatpush1.bf16.msra.mxu0 0
      %791 = vmatprep.subr.bf16.mxu0 0
      %792 = vmatpush1.bf16.msra.mxu0 0
      %793 = vmatprep.subr.bf16.mxu0 0
      %794 = vmatpush1.bf16.msra.mxu0 0
      %795 = vmatprep.subr.bf16.mxu0 0
      %796 = vmatpush1.bf16.msra.mxu0 %v750
      %797 = vmatprep.subr.bf16.mxu0 0
      %798 = vmatpush1.bf16.msra.mxu0 %v749
      %799 = vmatprep.subr.bf16.mxu0 0
      %800 = vmatpush2.bf16.msra.mxu0 0
      %801 = vmatprep.subr.bf16.mxu0 0
      %802 = vmatpush2.bf16.msra.mxu0 0
      %803 = vmatprep.subr.bf16.mxu0 0
      %804 = vmatpush2.bf16.msra.mxu0 0
      %805 = vmatprep.subr.bf16.mxu0 0
      %806 = vmatpush2.bf16.msra.mxu0 0
      %807 = vmatprep.subr.bf16.mxu0 0
      %808 = vmatpush2.bf16.msra.mxu0 0
      %809 = vmatprep.subr.bf16.mxu0 0
      %810 = vmatpush2.bf16.msra.mxu0 0
      %811 = vmatprep.subr.bf16.mxu0 0
      %812 = vmatpush2.bf16.msra.mxu0 0
      %813 = vmatprep.subr.bf16.mxu0 0
      %814 = vmatpush2.bf16.msra.mxu0 0
      %815 = vmatprep.mubr.bf16.mxu0 0
      %816 = vmatmul.mubr.bf16.gmra.mxu0 %v754
      %v817 = vpop.f32.mrf.mxu0
      %v818 = vadd.f32 0.0, %v817
      %v819 = vpop.f32.mrf.mxu0
      %v820 = vpop.f32.mrf.mxu0
      %v821 = vadd.f32 0.0, %v820
      %v822 = vpop.f32.mrf.mxu0
      %823 = vmatprep.mubr.bf16.mxu0 0
      %824 = vmatmul.mubr.bf16.gmra.mxu0 %v757
      %v825 = vpop.f32.mrf.mxu0
      %v826 = vadd.f32 0.0, %v825
      %v827 = vpop.f32.mrf.mxu0
      %v828 = vpop.f32.mrf.mxu0
      %v829 = vadd.f32 0.0, %v828
      %v830 = vpop.f32.mrf.mxu0
      %831 = vmatprep.mubr.bf16.mxu0 0
      %832 = vmatmul.mubr.bf16.gmra.mxu0 %v760
      %v833 = vpop.f32.mrf.mxu0
      %v834 = vadd.f32 0.0, %v833
      %v835 = vpop.f32.mrf.mxu0
      %v836 = vpop.f32.mrf.mxu0
      %v837 = vadd.f32 0.0, %v836
      %v838 = vpop.f32.mrf.mxu0
      %839 = vmatprep.mubr.bf16.mxu0 0
      %840 = vmatmul.mubr.bf16.gmra.mxu0 %v763
      %v841 = vpop.f32.mrf.mxu0
      %v842 = vadd.f32 0.0, %v841
      %v843 = vpop.f32.mrf.mxu0
      %v844 = vpop.f32.mrf.mxu0
      %v845 = vadd.f32 0.0, %v844
      %v846 = vpop.f32.mrf.mxu0
      %847 = vmatprep.mubr.bf16.mxu0 0
      %848 = vmatmul.mubr.bf16.gmra.mxu0 %v766
      %v849 = vpop.f32.mrf.mxu0
      %v850 = vadd.f32 0.0, %v849
      %v851 = vpop.f32.mrf.mxu0
      %v852 = vpop.f32.mrf.mxu0
      %v853 = vadd.f32 0.0, %v852
      %v854 = vpop.f32.mrf.mxu0
      %855 = vmatprep.mubr.bf16.mxu0 0
      %856 = vmatmul.mubr.bf16.gmra.mxu0 %v769
      %v857 = vpop.f32.mrf.mxu0
      %v858 = vadd.f32 0.0, %v857
      %v859 = vpop.f32.mrf.mxu0
      %v860 = vpop.f32.mrf.mxu0
      %v861 = vadd.f32 0.0, %v860
      %v862 = vpop.f32.mrf.mxu0
      %863 = vmatprep.mubr.bf16.mxu0 0
      %864 = vmatmul.mubr.bf16.gmra.mxu0 %v772
      %v865 = vpop.f32.mrf.mxu0
      %v866 = vadd.f32 0.0, %v865
      %v867 = vpop.f32.mrf.mxu0
      %v868 = vpop.f32.mrf.mxu0
      %v869 = vadd.f32 0.0, %v868
      %v870 = vpop.f32.mrf.mxu0
      %871 = vmatprep.mubr.bf16.mxu0 0
      %872 = vmatmul.mubr.bf16.gmra.mxu0 %v775
      %v873 = vpop.f32.mrf.mxu0
      %v874 = vadd.f32 0.0, %v873
      %v875 = vpop.f32.mrf.mxu0
      %v876 = vpop.f32.mrf.mxu0
      %v877 = vadd.f32 0.0, %v876
      %v878 = vpop.f32.mrf.mxu0
      %879 = vmatprep.mubr.bf16.mxu0 0
      %880 = vmatmul.mubr.bf16.gmra.mxu0 %v778
      %v881 = vpop.f32.mrf.mxu0
      %v882 = vadd.f32 0.0, %v881
      %v883 = vpop.f32.mrf.mxu0
      %v884 = vpop.f32.mrf.mxu0
      %v885 = vadd.f32 0.0, %v884
      %v886 = vpop.f32.mrf.mxu0
      %887 = vmatprep.mubr.bf16.mxu0 0
      %888 = vmatmul.mubr.bf16.gmra.mxu0 %v781
      %v889 = vpop.f32.mrf.mxu0
      %v890 = vadd.f32 0.0, %v889
      %v891 = vpop.f32.mrf.mxu0
      %v892 = vpop.f32.mrf.mxu0
      %v893 = vadd.f32 0.0, %v892
      %v894 = vpop.f32.mrf.mxu0
      %895 = vdwg.mxu0
      %v896 = vadd.f32 %v638, %v818
      %v897 = vadd.f32 %v641, %v821
      %v898 = vadd.f32 %v646, %v826
      %v899 = vadd.f32 %v649, %v829
      %v900 = vadd.f32 %v654, %v834
      %v901 = vadd.f32 %v657, %v837
      %v902 = vadd.f32 %v662, %v842
      %v903 = vadd.f32 %v665, %v845
      %v904 = vadd.f32 %v670, %v850
      %v905 = vadd.f32 %v673, %v853
      %v906 = vadd.f32 %v678, %v858
      %v907 = vadd.f32 %v681, %v861
      %v908 = vadd.f32 %v686, %v866
      %v909 = vadd.f32 %v689, %v869
      %v910 = vadd.f32 %v694, %v874
      %v911 = vadd.f32 %v697, %v877
      %v912 = vadd.f32 %v702, %v882
      %v913 = vadd.f32 %v705, %v885
      %v914 = vadd.f32 %v710, %v890
      %v915 = vadd.f32 %v713, %v893
      %v916 = vld [vmem:[%s2] sm:$0x1]
      %v918 = vlaneseq
      %v919 = vshrl.u32 %v918, 7
      %v920 = vsub.s32 0, %v919
      %v921 = vrot.slane %v916, %v920
      %v923 = vadd.f32 %v896, %v921
      %v924 = vadd.f32 %v897, %v921
      %v925 = vadd.f32 %v898, %v921
      %v926 = vadd.f32 %v899, %v921
      %v927 = vadd.f32 %v900, %v921
      %v928 = vadd.f32 %v901, %v921
      %v929 = vadd.f32 %v902, %v921
      %v930 = vadd.f32 %v903, %v921
      %v931 = vadd.f32 %v904, %v921
      %v932 = vadd.f32 %v905, %v921
      %v933 = vadd.f32 %v906, %v921
      %v934 = vadd.f32 %v907, %v921
      %v935 = vadd.f32 %v908, %v921
      %v936 = vadd.f32 %v909, %v921
      %v937 = vadd.f32 %v910, %v921
      %v938 = vadd.f32 %v911, %v921
      %v939 = vadd.f32 %v912, %v921
      %v940 = vadd.f32 %v913, %v921
      %v941 = vadd.f32 %v914, %v921
      %v942 = vadd.f32 %v915, %v921
      %vm943 = vcmp.gt.f32.partialorder %v923, 0.0
      %vm944 = vcmp.gt.f32.partialorder %v924, 0.0
      %vm945 = vcmp.gt.f32.partialorder %v925, 0.0
      %vm946 = vcmp.gt.f32.partialorder %v926, 0.0
      %vm947 = vcmp.gt.f32.partialorder %v927, 0.0
      %vm948 = vcmp.gt.f32.partialorder %v928, 0.0
      %vm949 = vcmp.gt.f32.partialorder %v929, 0.0
      %vm950 = vcmp.gt.f32.partialorder %v930, 0.0
      %vm951 = vcmp.gt.f32.partialorder %v931, 0.0
      %vm952 = vcmp.gt.f32.partialorder %v932, 0.0
      %vm953 = vcmp.gt.f32.partialorder %v933, 0.0
      %vm954 = vcmp.gt.f32.partialorder %v934, 0.0
      %vm955 = vcmp.gt.f32.partialorder %v935, 0.0
      %vm956 = vcmp.gt.f32.partialorder %v936, 0.0
      %vm957 = vcmp.gt.f32.partialorder %v937, 0.0
      %vm958 = vcmp.gt.f32.partialorder %v938, 0.0
      %vm959 = vcmp.gt.f32.partialorder %v939, 0.0
      %vm960 = vcmp.gt.f32.partialorder %v940, 0.0
      %vm961 = vcmp.gt.f32.partialorder %v941, 0.0
      %vm962 = vcmp.gt.f32.partialorder %v942, 0.0
      %v963 = vmul.f32 %v923, 0.01
      %v964 = vmul.f32 %v924, 0.01
      %v965 = vmul.f32 %v925, 0.01
      %v966 = vmul.f32 %v926, 0.01
      %v967 = vmul.f32 %v927, 0.01
      %v968 = vmul.f32 %v928, 0.01
      %v969 = vmul.f32 %v929, 0.01
      %v970 = vmul.f32 %v930, 0.01
      %v971 = vmul.f32 %v931, 0.01
      %v972 = vmul.f32 %v932, 0.01
      %v973 = vmul.f32 %v933, 0.01
      %v974 = vmul.f32 %v934, 0.01
      %v975 = vmul.f32 %v935, 0.01
      %v976 = vmul.f32 %v936, 0.01
      %v977 = vmul.f32 %v937, 0.01
      %v978 = vmul.f32 %v938, 0.01
      %v979 = vmul.f32 %v939, 0.01
      %v980 = vmul.f32 %v940, 0.01
      %v981 = vmul.f32 %v941, 0.01
      %v982 = vmul.f32 %v942, 0.01
      %v983 = vsel %vm943, %v923, %v963
      %v984 = vsel %vm944, %v924, %v964
      %v985 = vsel %vm945, %v925, %v965
      %v986 = vsel %vm946, %v926, %v966
      %v987 = vsel %vm947, %v927, %v967
      %v988 = vsel %vm948, %v928, %v968
      %v989 = vsel %vm949, %v929, %v969
      %v990 = vsel %vm950, %v930, %v970
      %v991 = vsel %vm951, %v931, %v971
      %v992 = vsel %vm952, %v932, %v972
      %v993 = vsel %vm953, %v933, %v973
      %v994 = vsel %vm954, %v934, %v974
      %v995 = vsel %vm955, %v935, %v975
      %v996 = vsel %vm956, %v936, %v976
      %v997 = vsel %vm957, %v937, %v977
      %v998 = vsel %vm958, %v938, %v978
      %v999 = vsel %vm959, %v939, %v979
      %v1000 = vsel %vm960, %v940, %v980
      %v1001 = vsel %vm961, %v941, %v981
      %v1002 = vsel %vm962, %v942, %v982
      %v1003 = vld [vmem:[%s5] sm:$0xff]
      %v1004 = vld [vmem:[%s5 + $0x8] sm:$0xff]
      %v1005 = vld [vmem:[%s5 + $0x10] sm:$0xff]
      %v1006 = vld [vmem:[%s5 + $0x18] sm:$0xff]
      %v1007 = vld [vmem:[%s5 + $0x20] sm:$0xff]
      %v1008 = vld [vmem:[%s5 + $0x28] sm:$0xff]
      %v1009 = vld [vmem:[%s5 + $0x30] sm:$0xff]
      %v1010 = vld [vmem:[%s5 + $0x38] sm:$0xff]
      %v1011 = vld [vmem:[%s5 + $0x40] sm:$0xff]
      %v1012 = vld [vmem:[%s5 + $0x48] sm:$0xff]
      %v1013 = vld [vmem:[%s5 + $0x50] sm:$0xff]
      %v1014 = vld [vmem:[%s5 + $0x58] sm:$0xff]
      %v1015 = vld [vmem:[%s5 + $0x60] sm:$0xff]
      %v1016 = vld [vmem:[%s5 + $0x68] sm:$0xff]
      %v1017 = vld [vmem:[%s5 + $0x70] sm:$0xff]
      %v1018 = vld [vmem:[%s5 + $0x78] sm:$0xff]
      %v1019 = vld [vmem:[%s5 + $0x80] sm:$0xff]
      %v1020 = vld [vmem:[%s5 + $0x88] sm:$0xff]
      %v1021 = vld [vmem:[%s5 + $0x90] sm:$0xff]
      %v1022 = vld [vmem:[%s5 + $0x98] sm:$0x3f]
      %1024 = vset.pattern.permute.xlu0 0
      %1025 = vperm.xlu0 %1024, %v1003
      %v1026 = vpop.permute.xlu0 %1025
      %1029 = vset.pattern.permute.xlu0 0
      %1030 = vperm.xlu0 %1029, %v1004
      %v1031 = vpop.permute.xlu0 %1030
      %1034 = vset.pattern.permute.xlu0 0
      %1035 = vperm.xlu0 %1034, %v1005
      %v1036 = vpop.permute.xlu0 %1035
      %1039 = vset.pattern.permute.xlu0 0
      %1040 = vperm.xlu0 %1039, %v1006
      %v1041 = vpop.permute.xlu0 %1040
      %1044 = vset.pattern.permute.xlu0 0
      %1045 = vperm.xlu0 %1044, %v1007
      %v1046 = vpop.permute.xlu0 %1045
      %1049 = vset.pattern.permute.xlu0 0
      %1050 = vperm.xlu0 %1049, %v1008
      %v1051 = vpop.permute.xlu0 %1050
      %1054 = vset.pattern.permute.xlu0 0
      %1055 = vperm.xlu0 %1054, %v1009
      %v1056 = vpop.permute.xlu0 %1055
      %1059 = vset.pattern.permute.xlu0 0
      %1060 = vperm.xlu0 %1059, %v1010
      %v1061 = vpop.permute.xlu0 %1060
      %1064 = vset.pattern.permute.xlu0 0
      %1065 = vperm.xlu0 %1064, %v1011
      %v1066 = vpop.permute.xlu0 %1065
      %1069 = vset.pattern.permute.xlu0 0
      %1070 = vperm.xlu0 %1069, %v1012
      %v1071 = vpop.permute.xlu0 %1070
      %1074 = vset.pattern.permute.xlu0 0
      %1075 = vperm.xlu0 %1074, %v1013
      %v1076 = vpop.permute.xlu0 %1075
      %1079 = vset.pattern.permute.xlu0 0
      %1080 = vperm.xlu0 %1079, %v1014
      %v1081 = vpop.permute.xlu0 %1080
      %1084 = vset.pattern.permute.xlu0 0
      %1085 = vperm.xlu0 %1084, %v1015
      %v1086 = vpop.permute.xlu0 %1085
      %1089 = vset.pattern.permute.xlu0 0
      %1090 = vperm.xlu0 %1089, %v1016
      %v1091 = vpop.permute.xlu0 %1090
      %1094 = vset.pattern.permute.xlu0 0
      %1095 = vperm.xlu0 %1094, %v1017
      %v1096 = vpop.permute.xlu0 %1095
      %1099 = vset.pattern.permute.xlu0 0
      %1100 = vperm.xlu0 %1099, %v1018
      %v1101 = vpop.permute.xlu0 %1100
      %1104 = vset.pattern.permute.xlu0 0
      %1105 = vperm.xlu0 %1104, %v1019
      %v1106 = vpop.permute.xlu0 %1105
      %1109 = vset.pattern.permute.xlu0 0
      %1110 = vperm.xlu0 %1109, %v1020
      %v1111 = vpop.permute.xlu0 %1110
      %1114 = vset.pattern.permute.xlu0 0
      %1115 = vperm.xlu0 %1114, %v1021
      %v1116 = vpop.permute.xlu0 %1115
      %1119 = vset.pattern.permute.xlu0 0
      %1120 = vperm.xlu0 %1119, %v1022
      %v1121 = vpop.permute.xlu0 %1120
      %v1123 = vmul.f32 %v983, %v1026
      %v1124 = vmul.f32 %v984, %v1031
      %v1125 = vmul.f32 %v985, %v1036
      %v1126 = vmul.f32 %v986, %v1041
      %v1127 = vmul.f32 %v987, %v1046
      %v1128 = vmul.f32 %v988, %v1051
      %v1129 = vmul.f32 %v989, %v1056
      %v1130 = vmul.f32 %v990, %v1061
      %v1131 = vmul.f32 %v991, %v1066
      %v1132 = vmul.f32 %v992, %v1071
      %v1133 = vmul.f32 %v993, %v1076
      %v1134 = vmul.f32 %v994, %v1081
      %v1135 = vmul.f32 %v995, %v1086
      %v1136 = vmul.f32 %v996, %v1091
      %v1137 = vmul.f32 %v997, %v1096
      %v1138 = vmul.f32 %v998, %v1101
      %v1139 = vmul.f32 %v999, %v1106
      %v1140 = vmul.f32 %v1000, %v1111
      %v1141 = vmul.f32 %v1001, %v1116
      %v1142 = vmul.f32 %v1002, %v1121
      %v1143 = vpack.c.bf16 %v1124, %v1123
      %v1144 = vpack.c.bf16 %v1126, %v1125
      %v1145 = vpack.c.bf16 %v1128, %v1127
      %v1146 = vpack.c.bf16 %v1130, %v1129
      %v1147 = vpack.c.bf16 %v1132, %v1131
      %v1148 = vpack.c.bf16 %v1134, %v1133
      %v1149 = vpack.c.bf16 %v1136, %v1135
      %v1150 = vpack.c.bf16 %v1138, %v1137
      %v1151 = vpack.c.bf16 %v1140, %v1139
      %v1152 = vpack.c.bf16 %v1142, %v1141
      %v1153 = vld [vmem:[%s3] sm:$0xf]
      %v1154 = vld [vmem:[%s3 + $0x4] sm:$0xf]
      %v1155 = vld [vmem:[%s3 + $0x8] sm:$0xf]
      %v1156 = vld [vmem:[%s3 + $0xc] sm:$0xf]
      %s1157 = scalar_lea.vmem %s3, 16
      %v1158 = vld [vmem:[%s1157] sm:$0xf]
      %v1159 = vld [vmem:[%s1157 + $0x4] sm:$0xf]
      %v1160 = vld [vmem:[%s1157 + $0x8] sm:$0xf]
      %v1161 = vld [vmem:[%s1157 + $0xc] sm:$0xf]
      %v1163 = vshrl.u32 %v1143, 16
      %v1165 = vshll.u32 %v1143, 16
      %v1167 = vrot.slane %v1165, 1
      %v1168 = vor.u32 %v1163, %v1167
      %v1170 = vshll.u32 %v1144, 16
      %v1172 = vrot.slane %v1170, 1
      %v1173 = vsel %vm335, %v1168, %v1172
      %v1174 = vshrl.u32 %v1144, 16
      %v1176 = vor.u32 %v1174, %v1172
      %v1178 = vshll.u32 %v1145, 16
      %v1180 = vrot.slane %v1178, 1
      %v1181 = vsel %vm335, %v1176, %v1180
      %v1182 = vshrl.u32 %v1145, 16
      %v1184 = vor.u32 %v1182, %v1180
      %v1186 = vshll.u32 %v1146, 16
      %v1188 = vrot.slane %v1186, 1
      %v1189 = vsel %vm335, %v1184, %v1188
      %v1190 = vshrl.u32 %v1146, 16
      %v1192 = vor.u32 %v1190, %v1188
      %v1194 = vshll.u32 %v1147, 16
      %v1196 = vrot.slane %v1194, 1
      %v1197 = vsel %vm335, %v1192, %v1196
      %v1198 = vshrl.u32 %v1147, 16
      %v1200 = vor.u32 %v1198, %v1196
      %v1202 = vshll.u32 %v1148, 16
      %v1204 = vrot.slane %v1202, 1
      %v1205 = vsel %vm335, %v1200, %v1204
      %v1206 = vshrl.u32 %v1148, 16
      %v1208 = vor.u32 %v1206, %v1204
      %v1210 = vshll.u32 %v1149, 16
      %v1212 = vrot.slane %v1210, 1
      %v1213 = vsel %vm335, %v1208, %v1212
      %v1214 = vshrl.u32 %v1149, 16
      %v1216 = vor.u32 %v1214, %v1212
      %v1218 = vshll.u32 %v1150, 16
      %v1220 = vrot.slane %v1218, 1
      %v1221 = vsel %vm335, %v1216, %v1220
      %v1222 = vshrl.u32 %v1150, 16
      %v1224 = vor.u32 %v1222, %v1220
      %v1226 = vshll.u32 %v1151, 16
      %v1228 = vrot.slane %v1226, 1
      %v1229 = vsel %vm335, %v1224, %v1228
      %v1230 = vshrl.u32 %v1151, 16
      %v1232 = vor.u32 %v1230, %v1228
      %v1234 = vshll.u32 %v1152, 16
      %v1236 = vrot.slane %v1234, 1
      %v1237 = vsel %vm335, %v1232, %v1236
      %v1238 = vshrl.u32 %v1152, 16
      %v1240 = vor.u32 %v1238, %v1236
      %v1245 = vunpack.c.l.b16 %v1158
      %v1246 = vunpack.c.l.b16 %v1159
      %v1247 = vunpack.c.l.b16 %v1160
      %v1248 = vunpack.c.l.b16 %v1161
      %v1249 = vpack.c.b16 %v1246, %v1245
      %v1250 = vpack.c.b16 %v1248, %v1247
      %v1254 = vsel %vm427, %v1173, 0
      %v1257 = vsel %vm427, %v1181, 0
      %v1260 = vsel %vm427, %v1189, 0
      %v1263 = vsel %vm427, %v1197, 0
      %v1266 = vsel %vm427, %v1205, 0
      %v1269 = vsel %vm427, %v1213, 0
      %v1272 = vsel %vm427, %v1221, 0
      %v1275 = vsel %vm427, %v1229, 0
      %v1278 = vsel %vm427, %v1237, 0
      %v1281 = vsel %vm427, %v1240, 0
      %1283 = vmatprep.subr.bf16.mxu0 0
      %1284 = vmatpush1.bf16.msra.mxu0 0
      %1285 = vmatprep.subr.bf16.mxu0 0
      %1286 = vmatpush1.bf16.msra.mxu0 0
      %1287 = vmatprep.subr.bf16.mxu0 0
      %1288 = vmatpush1.bf16.msra.mxu0 0
      %1289 = vmatprep.subr.bf16.mxu0 0
      %1290 = vmatpush1.bf16.msra.mxu0 0
      %1291 = vmatprep.subr.bf16.mxu0 0
      %1292 = vmatpush1.bf16.msra.mxu0 0
      %1293 = vmatprep.subr.bf16.mxu0 0
      %1294 = vmatpush1.bf16.msra.mxu0 0
      %1295 = vmatprep.subr.bf16.mxu0 0
      %1296 = vmatpush1.bf16.msra.mxu0 %v1250
      %1297 = vmatprep.subr.bf16.mxu0 0
      %1298 = vmatpush1.bf16.msra.mxu0 %v1249
      %1299 = vmatprep.subr.bf16.mxu0 0
      %1300 = vmatpush2.bf16.msra.mxu0 0
      %1301 = vmatprep.subr.bf16.mxu0 0
      %1302 = vmatpush2.bf16.msra.mxu0 0
      %1303 = vmatprep.subr.bf16.mxu0 0
      %1304 = vmatpush2.bf16.msra.mxu0 0
      %1305 = vmatprep.subr.bf16.mxu0 0
      %1306 = vmatpush2.bf16.msra.mxu0 0
      %1307 = vmatprep.subr.bf16.mxu0 0
      %1308 = vmatpush2.bf16.msra.mxu0 0
      %1309 = vmatprep.subr.bf16.mxu0 0
      %1310 = vmatpush2.bf16.msra.mxu0 0
      %1311 = vmatprep.subr.bf16.mxu0 0
      %1312 = vmatpush2.bf16.msra.mxu0 0
      %1313 = vmatprep.subr.bf16.mxu0 0
      %1314 = vmatpush2.bf16.msra.mxu0 0
      %1315 = vmatprep.mubr.bf16.mxu0 0
      %1316 = vmatmul.mubr.bf16.gmra.mxu0 %v1254
      %v1317 = vpop.f32.mrf.mxu0
      %v1318 = vadd.f32 0.0, %v1317
      %v1319 = vpop.f32.mrf.mxu0
      %v1320 = vpop.f32.mrf.mxu0
      %v1321 = vadd.f32 0.0, %v1320
      %v1322 = vpop.f32.mrf.mxu0
      %1323 = vmatprep.mubr.bf16.mxu0 0
      %1324 = vmatmul.mubr.bf16.gmra.mxu0 %v1257
      %v1325 = vpop.f32.mrf.mxu0
      %v1326 = vadd.f32 0.0, %v1325
      %v1327 = vpop.f32.mrf.mxu0
      %v1328 = vpop.f32.mrf.mxu0
      %v1329 = vadd.f32 0.0, %v1328
      %v1330 = vpop.f32.mrf.mxu0
      %1331 = vmatprep.mubr.bf16.mxu0 0
      %1332 = vmatmul.mubr.bf16.gmra.mxu0 %v1260
      %v1333 = vpop.f32.mrf.mxu0
      %v1334 = vadd.f32 0.0, %v1333
      %v1335 = vpop.f32.mrf.mxu0
      %v1336 = vpop.f32.mrf.mxu0
      %v1337 = vadd.f32 0.0, %v1336
      %v1338 = vpop.f32.mrf.mxu0
      %1339 = vmatprep.mubr.bf16.mxu0 0
      %1340 = vmatmul.mubr.bf16.gmra.mxu0 %v1263
      %v1341 = vpop.f32.mrf.mxu0
      %v1342 = vadd.f32 0.0, %v1341
      %v1343 = vpop.f32.mrf.mxu0
      %v1344 = vpop.f32.mrf.mxu0
      %v1345 = vadd.f32 0.0, %v1344
      %v1346 = vpop.f32.mrf.mxu0
      %1347 = vmatprep.mubr.bf16.mxu0 0
      %1348 = vmatmul.mubr.bf16.gmra.mxu0 %v1266
      %v1349 = vpop.f32.mrf.mxu0
      %v1350 = vadd.f32 0.0, %v1349
      %v1351 = vpop.f32.mrf.mxu0
      %v1352 = vpop.f32.mrf.mxu0
      %v1353 = vadd.f32 0.0, %v1352
      %v1354 = vpop.f32.mrf.mxu0
      %1355 = vmatprep.mubr.bf16.mxu0 0
      %1356 = vmatmul.mubr.bf16.gmra.mxu0 %v1269
      %v1357 = vpop.f32.mrf.mxu0
      %v1358 = vadd.f32 0.0, %v1357
      %v1359 = vpop.f32.mrf.mxu0
      %v1360 = vpop.f32.mrf.mxu0
      %v1361 = vadd.f32 0.0, %v1360
      %v1362 = vpop.f32.mrf.mxu0
      %1363 = vmatprep.mubr.bf16.mxu0 0
      %1364 = vmatmul.mubr.bf16.gmra.mxu0 %v1272
      %v1365 = vpop.f32.mrf.mxu0
      %v1366 = vadd.f32 0.0, %v1365
      %v1367 = vpop.f32.mrf.mxu0
      %v1368 = vpop.f32.mrf.mxu0
      %v1369 = vadd.f32 0.0, %v1368
      %v1370 = vpop.f32.mrf.mxu0
      %1371 = vmatprep.mubr.bf16.mxu0 0
      %1372 = vmatmul.mubr.bf16.gmra.mxu0 %v1275
      %v1373 = vpop.f32.mrf.mxu0
      %v1374 = vadd.f32 0.0, %v1373
      %v1375 = vpop.f32.mrf.mxu0
      %v1376 = vpop.f32.mrf.mxu0
      %v1377 = vadd.f32 0.0, %v1376
      %v1378 = vpop.f32.mrf.mxu0
      %1379 = vmatprep.mubr.bf16.mxu0 0
      %1380 = vmatmul.mubr.bf16.gmra.mxu0 %v1278
      %v1381 = vpop.f32.mrf.mxu0
      %v1382 = vadd.f32 0.0, %v1381
      %v1383 = vpop.f32.mrf.mxu0
      %v1384 = vpop.f32.mrf.mxu0
      %v1385 = vadd.f32 0.0, %v1384
      %v1386 = vpop.f32.mrf.mxu0
      %1387 = vmatprep.mubr.bf16.mxu0 0
      %1388 = vmatmul.mubr.bf16.gmra.mxu0 %v1281
      %v1389 = vpop.f32.mrf.mxu0
      %v1390 = vadd.f32 0.0, %v1389
      %v1391 = vpop.f32.mrf.mxu0
      %v1392 = vpop.f32.mrf.mxu0
      %v1393 = vadd.f32 0.0, %v1392
      %v1394 = vpop.f32.mrf.mxu0
      %1395 = vdwg.mxu0
      %v1400 = vunpack.c.l.b16 %v1153
      %v1401 = vunpack.c.l.b16 %v1154
      %v1402 = vunpack.c.l.b16 %v1155
      %v1403 = vunpack.c.l.b16 %v1156
      %v1404 = vpack.c.b16 %v1401, %v1400
      %v1405 = vpack.c.b16 %v1403, %v1402
      %v1408 = vsel %vm427, %v1143, 0
      %v1410 = vsel %vm427, %v1144, 0
      %v1412 = vsel %vm427, %v1145, 0
      %v1414 = vsel %vm427, %v1146, 0
      %v1416 = vsel %vm427, %v1147, 0
      %v1418 = vsel %vm427, %v1148, 0
      %v1420 = vsel %vm427, %v1149, 0
      %v1422 = vsel %vm427, %v1150, 0
      %v1424 = vsel %vm427, %v1151, 0
      %v1426 = vsel %vm427, %v1152, 0
      %1428 = vmatprep.subr.bf16.mxu0 0
      %1429 = vmatpush1.bf16.msra.mxu0 0
      %1430 = vmatprep.subr.bf16.mxu0 0
      %1431 = vmatpush1.bf16.msra.mxu0 0
      %1432 = vmatprep.subr.bf16.mxu0 0
      %1433 = vmatpush1.bf16.msra.mxu0 0
      %1434 = vmatprep.subr.bf16.mxu0 0
      %1435 = vmatpush1.bf16.msra.mxu0 0
      %1436 = vmatprep.subr.bf16.mxu0 0
      %1437 = vmatpush1.bf16.msra.mxu0 0
      %1438 = vmatprep.subr.bf16.mxu0 0
      %1439 = vmatpush1.bf16.msra.mxu0 0
      %1440 = vmatprep.subr.bf16.mxu0 0
      %1441 = vmatpush1.bf16.msra.mxu0 %v1405
      %1442 = vmatprep.subr.bf16.mxu0 0
      %1443 = vmatpush1.bf16.msra.mxu0 %v1404
      %1444 = vmatprep.subr.bf16.mxu0 0
      %1445 = vmatpush2.bf16.msra.mxu0 0
      %1446 = vmatprep.subr.bf16.mxu0 0
      %1447 = vmatpush2.bf16.msra.mxu0 0
      %1448 = vmatprep.subr.bf16.mxu0 0
      %1449 = vmatpush2.bf16.msra.mxu0 0
      %1450 = vmatprep.subr.bf16.mxu0 0
      %1451 = vmatpush2.bf16.msra.mxu0 0
      %1452 = vmatprep.subr.bf16.mxu0 0
      %1453 = vmatpush2.bf16.msra.mxu0 0
      %1454 = vmatprep.subr.bf16.mxu0 0
      %1455 = vmatpush2.bf16.msra.mxu0 0
      %1456 = vmatprep.subr.bf16.mxu0 0
      %1457 = vmatpush2.bf16.msra.mxu0 0
      %1458 = vmatprep.subr.bf16.mxu0 0
      %1459 = vmatpush2.bf16.msra.mxu0 0
      %1460 = vmatprep.mubr.bf16.mxu0 0
      %1461 = vmatmul.mubr.bf16.gmra.mxu0 %v1408
      %v1462 = vpop.f32.mrf.mxu0
      %v1463 = vadd.f32 %v1318, %v1462
      %v1464 = vpop.f32.mrf.mxu0
      %v1465 = vpop.f32.mrf.mxu0
      %v1466 = vadd.f32 %v1321, %v1465
      %v1467 = vpop.f32.mrf.mxu0
      %1468 = vmatprep.mubr.bf16.mxu0 0
      %1469 = vmatmul.mubr.bf16.gmra.mxu0 %v1410
      %v1470 = vpop.f32.mrf.mxu0
      %v1471 = vadd.f32 %v1326, %v1470
      %v1472 = vpop.f32.mrf.mxu0
      %v1473 = vpop.f32.mrf.mxu0
      %v1474 = vadd.f32 %v1329, %v1473
      %v1475 = vpop.f32.mrf.mxu0
      %1476 = vmatprep.mubr.bf16.mxu0 0
      %1477 = vmatmul.mubr.bf16.gmra.mxu0 %v1412
      %v1478 = vpop.f32.mrf.mxu0
      %v1479 = vadd.f32 %v1334, %v1478
      %v1480 = vpop.f32.mrf.mxu0
      %v1481 = vpop.f32.mrf.mxu0
      %v1482 = vadd.f32 %v1337, %v1481
      %v1483 = vpop.f32.mrf.mxu0
      %1484 = vmatprep.mubr.bf16.mxu0 0
      %1485 = vmatmul.mubr.bf16.gmra.mxu0 %v1414
      %v1486 = vpop.f32.mrf.mxu0
      %v1487 = vadd.f32 %v1342, %v1486
      %v1488 = vpop.f32.mrf.mxu0
      %v1489 = vpop.f32.mrf.mxu0
      %v1490 = vadd.f32 %v1345, %v1489
      %v1491 = vpop.f32.mrf.mxu0
      %1492 = vmatprep.mubr.bf16.mxu0 0
      %1493 = vmatmul.mubr.bf16.gmra.mxu0 %v1416
      %v1494 = vpop.f32.mrf.mxu0
      %v1495 = vadd.f32 %v1350, %v1494
      %v1496 = vpop.f32.mrf.mxu0
      %v1497 = vpop.f32.mrf.mxu0
      %v1498 = vadd.f32 %v1353, %v1497
      %v1499 = vpop.f32.mrf.mxu0
      %1500 = vmatprep.mubr.bf16.mxu0 0
      %1501 = vmatmul.mubr.bf16.gmra.mxu0 %v1418
      %v1502 = vpop.f32.mrf.mxu0
      %v1503 = vadd.f32 %v1358, %v1502
      %v1504 = vpop.f32.mrf.mxu0
      %v1505 = vpop.f32.mrf.mxu0
      %v1506 = vadd.f32 %v1361, %v1505
      %v1507 = vpop.f32.mrf.mxu0
      %1508 = vmatprep.mubr.bf16.mxu0 0
      %1509 = vmatmul.mubr.bf16.gmra.mxu0 %v1420
      %v1510 = vpop.f32.mrf.mxu0
      %v1511 = vadd.f32 %v1366, %v1510
      %v1512 = vpop.f32.mrf.mxu0
      %v1513 = vpop.f32.mrf.mxu0
      %v1514 = vadd.f32 %v1369, %v1513
      %v1515 = vpop.f32.mrf.mxu0
      %1516 = vmatprep.mubr.bf16.mxu0 0
      %1517 = vmatmul.mubr.bf16.gmra.mxu0 %v1422
      %v1518 = vpop.f32.mrf.mxu0
      %v1519 = vadd.f32 %v1374, %v1518
      %v1520 = vpop.f32.mrf.mxu0
      %v1521 = vpop.f32.mrf.mxu0
      %v1522 = vadd.f32 %v1377, %v1521
      %v1523 = vpop.f32.mrf.mxu0
      %1524 = vmatprep.mubr.bf16.mxu0 0
      %1525 = vmatmul.mubr.bf16.gmra.mxu0 %v1424
      %v1526 = vpop.f32.mrf.mxu0
      %v1527 = vadd.f32 %v1382, %v1526
      %v1528 = vpop.f32.mrf.mxu0
      %v1529 = vpop.f32.mrf.mxu0
      %v1530 = vadd.f32 %v1385, %v1529
      %v1531 = vpop.f32.mrf.mxu0
      %1532 = vmatprep.mubr.bf16.mxu0 0
      %1533 = vmatmul.mubr.bf16.gmra.mxu0 %v1426
      %v1534 = vpop.f32.mrf.mxu0
      %v1535 = vadd.f32 %v1390, %v1534
      %v1536 = vpop.f32.mrf.mxu0
      %v1537 = vpop.f32.mrf.mxu0
      %v1538 = vadd.f32 %v1393, %v1537
      %v1539 = vpop.f32.mrf.mxu0
      %1540 = vdwg.mxu0
      %s1541 = scalar_lea.vmem %s3, 32
      %v1542 = vld [vmem:[%s1541] sm:$0xf]
      %v1543 = vld [vmem:[%s1541 + $0x4] sm:$0xf]
      %v1544 = vld [vmem:[%s1541 + $0x8] sm:$0xf]
      %v1545 = vld [vmem:[%s1541 + $0xc] sm:$0xf]
      %v1556 = vrot.slane %v1143, 1
      %v1557 = vrot.slane %v1144, 1
      %v1558 = vsel %vm721, %v1556, %v1557
      %v1559 = vrot.slane %v1145, 1
      %v1560 = vsel %vm721, %v1557, %v1559
      %v1561 = vrot.slane %v1146, 1
      %v1562 = vsel %vm721, %v1559, %v1561
      %v1563 = vrot.slane %v1147, 1
      %v1564 = vsel %vm721, %v1561, %v1563
      %v1565 = vrot.slane %v1148, 1
      %v1566 = vsel %vm721, %v1563, %v1565
      %v1567 = vrot.slane %v1149, 1
      %v1568 = vsel %vm721, %v1565, %v1567
      %v1569 = vrot.slane %v1150, 1
      %v1570 = vsel %vm721, %v1567, %v1569
      %v1571 = vrot.slane %v1151, 1
      %v1572 = vsel %vm721, %v1569, %v1571
      %v1573 = vrot.slane %v1152, 1
      %v1574 = vsel %vm721, %v1571, %v1573
      %v1579 = vunpack.c.l.b16 %v1542
      %v1580 = vunpack.c.l.b16 %v1543
      %v1581 = vunpack.c.l.b16 %v1544
      %v1582 = vunpack.c.l.b16 %v1545
      %v1583 = vpack.c.b16 %v1580, %v1579
      %v1584 = vpack.c.b16 %v1582, %v1581
      %v1588 = vsel %vm427, %v1558, 0
      %v1591 = vsel %vm427, %v1560, 0
      %v1594 = vsel %vm427, %v1562, 0
      %v1597 = vsel %vm427, %v1564, 0
      %v1600 = vsel %vm427, %v1566, 0
      %v1603 = vsel %vm427, %v1568, 0
      %v1606 = vsel %vm427, %v1570, 0
      %v1609 = vsel %vm427, %v1572, 0
      %v1612 = vsel %vm427, %v1574, 0
      %v1615 = vsel %vm427, %v1573, 0
      %1617 = vmatprep.subr.bf16.mxu0 0
      %1618 = vmatpush1.bf16.msra.mxu0 0
      %1619 = vmatprep.subr.bf16.mxu0 0
      %1620 = vmatpush1.bf16.msra.mxu0 0
      %1621 = vmatprep.subr.bf16.mxu0 0
      %1622 = vmatpush1.bf16.msra.mxu0 0
      %1623 = vmatprep.subr.bf16.mxu0 0
      %1624 = vmatpush1.bf16.msra.mxu0 0
      %1625 = vmatprep.subr.bf16.mxu0 0
      %1626 = vmatpush1.bf16.msra.mxu0 0
      %1627 = vmatprep.subr.bf16.mxu0 0
      %1628 = vmatpush1.bf16.msra.mxu0 0
      %1629 = vmatprep.subr.bf16.mxu0 0
      %1630 = vmatpush1.bf16.msra.mxu0 %v1584
      %1631 = vmatprep.subr.bf16.mxu0 0
      %1632 = vmatpush1.bf16.msra.mxu0 %v1583
      %1633 = vmatprep.subr.bf16.mxu0 0
      %1634 = vmatpush2.bf16.msra.mxu0 0
      %1635 = vmatprep.subr.bf16.mxu0 0
      %1636 = vmatpush2.bf16.msra.mxu0 0
      %1637 = vmatprep.subr.bf16.mxu0 0
      %1638 = vmatpush2.bf16.msra.mxu0 0
      %1639 = vmatprep.subr.bf16.mxu0 0
      %1640 = vmatpush2.bf16.msra.mxu0 0
      %1641 = vmatprep.subr.bf16.mxu0 0
      %1642 = vmatpush2.bf16.msra.mxu0 0
      %1643 = vmatprep.subr.bf16.mxu0 0
      %1644 = vmatpush2.bf16.msra.mxu0 0
      %1645 = vmatprep.subr.bf16.mxu0 0
      %1646 = vmatpush2.bf16.msra.mxu0 0
      %1647 = vmatprep.subr.bf16.mxu0 0
      %1648 = vmatpush2.bf16.msra.mxu0 0
      %1649 = vmatprep.mubr.bf16.mxu0 0
      %1650 = vmatmul.mubr.bf16.gmra.mxu0 %v1588
      %v1651 = vpop.f32.mrf.mxu0
      %v1652 = vadd.f32 0.0, %v1651
      %v1653 = vpop.f32.mrf.mxu0
      %v1654 = vpop.f32.mrf.mxu0
      %v1655 = vadd.f32 0.0, %v1654
      %v1656 = vpop.f32.mrf.mxu0
      %1657 = vmatprep.mubr.bf16.mxu0 0
      %1658 = vmatmul.mubr.bf16.gmra.mxu0 %v1591
      %v1659 = vpop.f32.mrf.mxu0
      %v1660 = vadd.f32 0.0, %v1659
      %v1661 = vpop.f32.mrf.mxu0
      %v1662 = vpop.f32.mrf.mxu0
      %v1663 = vadd.f32 0.0, %v1662
      %v1664 = vpop.f32.mrf.mxu0
      %1665 = vmatprep.mubr.bf16.mxu0 0
      %1666 = vmatmul.mubr.bf16.gmra.mxu0 %v1594
      %v1667 = vpop.f32.mrf.mxu0
      %v1668 = vadd.f32 0.0, %v1667
      %v1669 = vpop.f32.mrf.mxu0
      %v1670 = vpop.f32.mrf.mxu0
      %v1671 = vadd.f32 0.0, %v1670
      %v1672 = vpop.f32.mrf.mxu0
      %1673 = vmatprep.mubr.bf16.mxu0 0
      %1674 = vmatmul.mubr.bf16.gmra.mxu0 %v1597
      %v1675 = vpop.f32.mrf.mxu0
      %v1676 = vadd.f32 0.0, %v1675
      %v1677 = vpop.f32.mrf.mxu0
      %v1678 = vpop.f32.mrf.mxu0
      %v1679 = vadd.f32 0.0, %v1678
      %v1680 = vpop.f32.mrf.mxu0
      %1681 = vmatprep.mubr.bf16.mxu0 0
      %1682 = vmatmul.mubr.bf16.gmra.mxu0 %v1600
      %v1683 = vpop.f32.mrf.mxu0
      %v1684 = vadd.f32 0.0, %v1683
      %v1685 = vpop.f32.mrf.mxu0
      %v1686 = vpop.f32.mrf.mxu0
      %v1687 = vadd.f32 0.0, %v1686
      %v1688 = vpop.f32.mrf.mxu0
      %1689 = vmatprep.mubr.bf16.mxu0 0
      %1690 = vmatmul.mubr.bf16.gmra.mxu0 %v1603
      %v1691 = vpop.f32.mrf.mxu0
      %v1692 = vadd.f32 0.0, %v1691
      %v1693 = vpop.f32.mrf.mxu0
      %v1694 = vpop.f32.mrf.mxu0
      %v1695 = vadd.f32 0.0, %v1694
      %v1696 = vpop.f32.mrf.mxu0
      %1697 = vmatprep.mubr.bf16.mxu0 0
      %1698 = vmatmul.mubr.bf16.gmra.mxu0 %v1606
      %v1699 = vpop.f32.mrf.mxu0
      %v1700 = vadd.f32 0.0, %v1699
      %v1701 = vpop.f32.mrf.mxu0
      %v1702 = vpop.f32.mrf.mxu0
      %v1703 = vadd.f32 0.0, %v1702
      %v1704 = vpop.f32.mrf.mxu0
      %1705 = vmatprep.mubr.bf16.mxu0 0
      %1706 = vmatmul.mubr.bf16.gmra.mxu0 %v1609
      %v1707 = vpop.f32.mrf.mxu0
      %v1708 = vadd.f32 0.0, %v1707
      %v1709 = vpop.f32.mrf.mxu0
      %v1710 = vpop.f32.mrf.mxu0
      %v1711 = vadd.f32 0.0, %v1710
      %v1712 = vpop.f32.mrf.mxu0
      %1713 = vmatprep.mubr.bf16.mxu0 0
      %1714 = vmatmul.mubr.bf16.gmra.mxu0 %v1612
      %v1715 = vpop.f32.mrf.mxu0
      %v1716 = vadd.f32 0.0, %v1715
      %v1717 = vpop.f32.mrf.mxu0
      %v1718 = vpop.f32.mrf.mxu0
      %v1719 = vadd.f32 0.0, %v1718
      %v1720 = vpop.f32.mrf.mxu0
      %1721 = vmatprep.mubr.bf16.mxu0 0
      %1722 = vmatmul.mubr.bf16.gmra.mxu0 %v1615
      %v1723 = vpop.f32.mrf.mxu0
      %v1724 = vadd.f32 0.0, %v1723
      %v1725 = vpop.f32.mrf.mxu0
      %v1726 = vpop.f32.mrf.mxu0
      %v1727 = vadd.f32 0.0, %v1726
      %v1728 = vpop.f32.mrf.mxu0
      %1729 = vdwg.mxu0
      %v1730 = vadd.f32 %v1463, %v1652
      %v1731 = vadd.f32 %v1466, %v1655
      %v1732 = vadd.f32 %v1471, %v1660
      %v1733 = vadd.f32 %v1474, %v1663
      %v1734 = vadd.f32 %v1479, %v1668
      %v1735 = vadd.f32 %v1482, %v1671
      %v1736 = vadd.f32 %v1487, %v1676
      %v1737 = vadd.f32 %v1490, %v1679
      %v1738 = vadd.f32 %v1495, %v1684
      %v1739 = vadd.f32 %v1498, %v1687
      %v1740 = vadd.f32 %v1503, %v1692
      %v1741 = vadd.f32 %v1506, %v1695
      %v1742 = vadd.f32 %v1511, %v1700
      %v1743 = vadd.f32 %v1514, %v1703
      %v1744 = vadd.f32 %v1519, %v1708
      %v1745 = vadd.f32 %v1522, %v1711
      %v1746 = vadd.f32 %v1527, %v1716
      %v1747 = vadd.f32 %v1530, %v1719
      %v1748 = vadd.f32 %v1535, %v1724
      %v1749 = vadd.f32 %v1538, %v1727
      %v1750 = vld [vmem:[%s4] sm:$0x1]
      %v1752 = vlaneseq
      %v1753 = vshrl.u32 %v1752, 7
      %v1754 = vsub.s32 0, %v1753
      %v1755 = vrot.slane %v1750, %v1754
      %v1757 = vadd.f32 %v1730, %v1755
      %v1758 = vadd.f32 %v1731, %v1755
      %v1759 = vadd.f32 %v1732, %v1755
      %v1760 = vadd.f32 %v1733, %v1755
      %v1761 = vadd.f32 %v1734, %v1755
      %v1762 = vadd.f32 %v1735, %v1755
      %v1763 = vadd.f32 %v1736, %v1755
      %v1764 = vadd.f32 %v1737, %v1755
      %v1765 = vadd.f32 %v1738, %v1755
      %v1766 = vadd.f32 %v1739, %v1755
      %v1767 = vadd.f32 %v1740, %v1755
      %v1768 = vadd.f32 %v1741, %v1755
      %v1769 = vadd.f32 %v1742, %v1755
      %v1770 = vadd.f32 %v1743, %v1755
      %v1771 = vadd.f32 %v1744, %v1755
      %v1772 = vadd.f32 %v1745, %v1755
      %v1773 = vadd.f32 %v1746, %v1755
      %v1774 = vadd.f32 %v1747, %v1755
      %v1775 = vadd.f32 %v1748, %v1755
      %v1776 = vadd.f32 %v1749, %v1755
      %v1777 = vunpack.c.l.bf16 %v256
      %v1778 = vunpack.c.l.bf16 %v257
      %v1779 = vunpack.c.l.bf16 %v258
      %v1780 = vunpack.c.l.bf16 %v259
      %v1781 = vunpack.c.l.bf16 %v260
      %v1782 = vunpack.c.l.bf16 %v261
      %v1783 = vunpack.c.l.bf16 %v262
      %v1784 = vunpack.c.l.bf16 %v263
      %v1785 = vunpack.c.l.bf16 %v264
      %v1786 = vunpack.c.l.bf16 %v265
      %v1787 = vunpack.c.l.bf16 %v266
      %v1788 = vunpack.c.l.bf16 %v267
      %v1789 = vunpack.c.l.bf16 %v268
      %v1790 = vunpack.c.l.bf16 %v269
      %v1791 = vunpack.c.l.bf16 %v270
      %v1792 = vunpack.c.l.bf16 %v271
      %v1793 = vunpack.c.l.bf16 %v272
      %v1794 = vunpack.c.l.bf16 %v273
      %v1795 = vunpack.c.l.bf16 %v274
      %v1796 = vunpack.c.l.bf16 %v275
      %vm1817 = vcmask 1045504
      %v1818 = vrot.slane %v1777, 2
      %v1819 = vrot.slane %v1778, 2
      %v1820 = vsel %vm1817, %v1818, %v1819
      %v1821 = vrot.slane %v1779, 2
      %v1822 = vsel %vm1817, %v1819, %v1821
      %v1823 = vrot.slane %v1780, 2
      %v1824 = vsel %vm1817, %v1821, %v1823
      %v1825 = vrot.slane %v1781, 2
      %v1826 = vsel %vm1817, %v1823, %v1825
      %v1827 = vrot.slane %v1782, 2
      %v1828 = vsel %vm1817, %v1825, %v1827
      %v1829 = vrot.slane %v1783, 2
      %v1830 = vsel %vm1817, %v1827, %v1829
      %v1831 = vrot.slane %v1784, 2
      %v1832 = vsel %vm1817, %v1829, %v1831
      %v1833 = vrot.slane %v1785, 2
      %v1834 = vsel %vm1817, %v1831, %v1833
      %v1835 = vrot.slane %v1786, 2
      %v1836 = vsel %vm1817, %v1833, %v1835
      %v1837 = vrot.slane %v1787, 2
      %v1838 = vsel %vm1817, %v1835, %v1837
      %v1839 = vrot.slane %v1788, 2
      %v1840 = vsel %vm1817, %v1837, %v1839
      %v1841 = vrot.slane %v1789, 2
      %v1842 = vsel %vm1817, %v1839, %v1841
      %v1843 = vrot.slane %v1790, 2
      %v1844 = vsel %vm1817, %v1841, %v1843
      %v1845 = vrot.slane %v1791, 2
      %v1846 = vsel %vm1817, %v1843, %v1845
      %v1847 = vrot.slane %v1792, 2
      %v1848 = vsel %vm1817, %v1845, %v1847
      %v1849 = vrot.slane %v1793, 2
      %v1850 = vsel %vm1817, %v1847, %v1849
      %v1851 = vrot.slane %v1794, 2
      %v1852 = vsel %vm1817, %v1849, %v1851
      %v1853 = vrot.slane %v1795, 2
      %v1854 = vsel %vm1817, %v1851, %v1853
      %v1855 = vrot.slane %v1796, 2
      %v1856 = vsel %vm1817, %v1853, %v1855
      %v1877 = vadd.f32 %v1757, %v1820
      %v1878 = vadd.f32 %v1758, %v1822
      %v1879 = vadd.f32 %v1759, %v1824
      %v1880 = vadd.f32 %v1760, %v1826
      %v1881 = vadd.f32 %v1761, %v1828
      %v1882 = vadd.f32 %v1762, %v1830
      %v1883 = vadd.f32 %v1763, %v1832
      %v1884 = vadd.f32 %v1764, %v1834
      %v1885 = vadd.f32 %v1765, %v1836
      %v1886 = vadd.f32 %v1766, %v1838
      %v1887 = vadd.f32 %v1767, %v1840
      %v1888 = vadd.f32 %v1768, %v1842
      %v1889 = vadd.f32 %v1769, %v1844
      %v1890 = vadd.f32 %v1770, %v1846
      %v1891 = vadd.f32 %v1771, %v1848
      %v1892 = vadd.f32 %v1772, %v1850
      %v1893 = vadd.f32 %v1773, %v1852
      %v1894 = vadd.f32 %v1774, %v1854
      %v1895 = vadd.f32 %v1775, %v1856
      %v1896 = vadd.f32 %v1776, %v1855
      %vm1897 = vcmp.gt.f32.partialorder %v1877, 0.0
      %vm1898 = vcmp.gt.f32.partialorder %v1878, 0.0
      %vm1899 = vcmp.gt.f32.partialorder %v1879, 0.0
      %vm1900 = vcmp.gt.f32.partialorder %v1880, 0.0
      %vm1901 = vcmp.gt.f32.partialorder %v1881, 0.0
      %vm1902 = vcmp.gt.f32.partialorder %v1882, 0.0
      %vm1903 = vcmp.gt.f32.partialorder %v1883, 0.0
      %vm1904 = vcmp.gt.f32.partialorder %v1884, 0.0
      %vm1905 = vcmp.gt.f32.partialorder %v1885, 0.0
      %vm1906 = vcmp.gt.f32.partialorder %v1886, 0.0
      %vm1907 = vcmp.gt.f32.partialorder %v1887, 0.0
      %vm1908 = vcmp.gt.f32.partialorder %v1888, 0.0
      %vm1909 = vcmp.gt.f32.partialorder %v1889, 0.0
      %vm1910 = vcmp.gt.f32.partialorder %v1890, 0.0
      %vm1911 = vcmp.gt.f32.partialorder %v1891, 0.0
      %vm1912 = vcmp.gt.f32.partialorder %v1892, 0.0
      %vm1913 = vcmp.gt.f32.partialorder %v1893, 0.0
      %vm1914 = vcmp.gt.f32.partialorder %v1894, 0.0
      %vm1915 = vcmp.gt.f32.partialorder %v1895, 0.0
      %vm1916 = vcmp.gt.f32.partialorder %v1896, 0.0
      %v1917 = vmul.f32 %v1877, 0.01
      %v1918 = vmul.f32 %v1878, 0.01
      %v1919 = vmul.f32 %v1879, 0.01
      %v1920 = vmul.f32 %v1880, 0.01
      %v1921 = vmul.f32 %v1881, 0.01
      %v1922 = vmul.f32 %v1882, 0.01
      %v1923 = vmul.f32 %v1883, 0.01
      %v1924 = vmul.f32 %v1884, 0.01
      %v1925 = vmul.f32 %v1885, 0.01
      %v1926 = vmul.f32 %v1886, 0.01
      %v1927 = vmul.f32 %v1887, 0.01
      %v1928 = vmul.f32 %v1888, 0.01
      %v1929 = vmul.f32 %v1889, 0.01
      %v1930 = vmul.f32 %v1890, 0.01
      %v1931 = vmul.f32 %v1891, 0.01
      %v1932 = vmul.f32 %v1892, 0.01
      %v1933 = vmul.f32 %v1893, 0.01
      %v1934 = vmul.f32 %v1894, 0.01
      %v1935 = vmul.f32 %v1895, 0.01
      %v1936 = vmul.f32 %v1896, 0.01
      %v1937 = vsel %vm1897, %v1877, %v1917
      %v1938 = vsel %vm1898, %v1878, %v1918
      %v1939 = vsel %vm1899, %v1879, %v1919
      %v1940 = vsel %vm1900, %v1880, %v1920
      %v1941 = vsel %vm1901, %v1881, %v1921
      %v1942 = vsel %vm1902, %v1882, %v1922
      %v1943 = vsel %vm1903, %v1883, %v1923
      %v1944 = vsel %vm1904, %v1884, %v1924
      %v1945 = vsel %vm1905, %v1885, %v1925
      %v1946 = vsel %vm1906, %v1886, %v1926
      %v1947 = vsel %vm1907, %v1887, %v1927
      %v1948 = vsel %vm1908, %v1888, %v1928
      %v1949 = vsel %vm1909, %v1889, %v1929
      %v1950 = vsel %vm1910, %v1890, %v1930
      %v1951 = vsel %vm1911, %v1891, %v1931
      %v1952 = vsel %vm1912, %v1892, %v1932
      %v1953 = vsel %vm1913, %v1893, %v1933
      %v1954 = vsel %vm1914, %v1894, %v1934
      %v1955 = vsel %vm1915, %v1895, %v1935
      %v1956 = vsel %vm1916, %v1896, %v1936
      %v1957 = vpack.c.bf16 %v1938, %v1937
      %v1958 = vpack.c.bf16 %v1940, %v1939
      %v1959 = vpack.c.bf16 %v1942, %v1941
      %v1960 = vpack.c.bf16 %v1944, %v1943
      %v1961 = vpack.c.bf16 %v1946, %v1945
      %v1962 = vpack.c.bf16 %v1948, %v1947
      %v1963 = vpack.c.bf16 %v1950, %v1949
      %v1964 = vpack.c.bf16 %v1952, %v1951
      %v1965 = vpack.c.bf16 %v1954, %v1953
      %v1966 = vpack.c.bf16 %v1956, %v1955
      %v1977 = vunpack.c.l.b16 %v1957
      %v1978 = vunpack.c.h.b16 %v1957
      %v1979 = vunpack.c.l.b16 %v1958
      %v1980 = vunpack.c.h.b16 %v1958
      %v1981 = vunpack.c.l.b16 %v1959
      %v1982 = vunpack.c.h.b16 %v1959
      %v1983 = vunpack.c.l.b16 %v1960
      %v1984 = vunpack.c.h.b16 %v1960
      %v1985 = vunpack.c.l.b16 %v1961
      %v1986 = vunpack.c.h.b16 %v1961
      %v1987 = vunpack.c.l.b16 %v1962
      %v1988 = vunpack.c.h.b16 %v1962
      %v1989 = vunpack.c.l.b16 %v1963
      %v1990 = vunpack.c.h.b16 %v1963
      %v1991 = vunpack.c.l.b16 %v1964
      %v1992 = vunpack.c.h.b16 %v1964
      %v1993 = vunpack.c.l.b16 %v1965
      %v1994 = vunpack.c.h.b16 %v1965
      %v1995 = vunpack.c.l.b16 %v1966
      %v1996 = vunpack.c.h.b16 %v1966
      %v1997 = vpack.c.b16 %v1977, %v1977
      %v1998 = vpack.c.b16 %v1978, %v1978
      %v1999 = vpack.c.b16 %v1979, %v1979
      %v2000 = vpack.c.b16 %v1980, %v1980
      %v2001 = vpack.c.b16 %v1981, %v1981
      %v2002 = vpack.c.b16 %v1982, %v1982
      %v2003 = vpack.c.b16 %v1983, %v1983
      %v2004 = vpack.c.b16 %v1984, %v1984
      %v2005 = vpack.c.b16 %v1985, %v1985
      %v2006 = vpack.c.b16 %v1986, %v1986
      %v2007 = vpack.c.b16 %v1987, %v1987
      %v2008 = vpack.c.b16 %v1988, %v1988
      %v2009 = vpack.c.b16 %v1989, %v1989
      %v2010 = vpack.c.b16 %v1990, %v1990
      %v2011 = vpack.c.b16 %v1991, %v1991
      %v2012 = vpack.c.b16 %v1992, %v1992
      %v2013 = vpack.c.b16 %v1993, %v1993
      %v2014 = vpack.c.b16 %v1994, %v1994
      %v2015 = vpack.c.b16 %v1995, %v1995
      %v2016 = vpack.c.b16 %v1996, %v1996
      %vm2037 = vcmask 257024
      %2038 = vst.msk [vmem:[%s253] sm:$0xf] %vm2037, %v1997
      %2039 = vst.msk [vmem:[%s253 + $0x4] sm:$0xf] %vm2037, %v1998
      %2040 = vst.msk [vmem:[%s253 + $0x8] sm:$0xf] %vm2037, %v1999
      %2041 = vst.msk [vmem:[%s253 + $0xc] sm:$0xf] %vm2037, %v2000
      %2042 = vst.msk [vmem:[%s253 + $0x10] sm:$0xf] %vm2037, %v2001
      %2043 = vst.msk [vmem:[%s253 + $0x14] sm:$0xf] %vm2037, %v2002
      %2044 = vst.msk [vmem:[%s253 + $0x18] sm:$0xf] %vm2037, %v2003
      %2045 = vst.msk [vmem:[%s253 + $0x1c] sm:$0xf] %vm2037, %v2004
      %2046 = vst.msk [vmem:[%s253 + $0x20] sm:$0xf] %vm2037, %v2005
      %2047 = vst.msk [vmem:[%s253 + $0x24] sm:$0xf] %vm2037, %v2006
      %2048 = vst.msk [vmem:[%s253 + $0x28] sm:$0xf] %vm2037, %v2007
      %2049 = vst.msk [vmem:[%s253 + $0x2c] sm:$0xf] %vm2037, %v2008
      %2050 = vst.msk [vmem:[%s253 + $0x30] sm:$0xf] %vm2037, %v2009
      %2051 = vst.msk [vmem:[%s253 + $0x34] sm:$0xf] %vm2037, %v2010
      %2052 = vst.msk [vmem:[%s253 + $0x38] sm:$0xf] %vm2037, %v2011
      %2053 = vst.msk [vmem:[%s253 + $0x3c] sm:$0xf] %vm2037, %v2012
      %2054 = vst.msk [vmem:[%s253 + $0x40] sm:$0xf] %vm2037, %v2013
      %2055 = vst.msk [vmem:[%s253 + $0x44] sm:$0xf] %vm2037, %v2014
      %2056 = vst.msk [vmem:[%s253 + $0x48] sm:$0xf] %vm2037, %v2015
      %vm2057 = vcmask 254976
      %2058 = vst.msk [vmem:[%s253 + $0x4c] sm:$0x3] %vm2057, %v2016
      %s2059 = smul.u32 20, %s17
      %p2060 = scmp.lt.s32.totalorder %s2059, 79
      %s2061 = scalar_select %p2060, %s2059, 79
      %s2062 = smul.addr %s2061, 4
      %s2063 = scalar_lea.vmem %s6, %s2062
      // Predicated region
      $region45: #{tpu_custom_call.1} parent=43 // pred_check
        %p2064 = pneg %p166
      $region46: #{tpu_custom_call.1} parent=43 // pred_check_branch
        %2066 = sbr.rel (%p2064) target = $region48
      $region47: #{tpu_custom_call.1} parent=43 // pred_region
        %s2067 = smul.u32 20, %s17
      $region48: #{tpu_custom_call.1} parent=43 // pred_fallthru
        _
    $region44: #{tpu_custom_call.1} parent=5 // pred_fallthru
      _
    %p2068 = scmp.le.s32.totalorder 2, %s12
    // Predicated region
    $region49: #{tpu_custom_call.1} parent=5 // pred_check
      %p2069 = pneg %p2068
    $region50: #{tpu_custom_call.1} parent=5 // pred_check_branch
      %2071 = sbr.rel (%p2069) target = $region52
    $region51: #{tpu_custom_call.1} parent=5 // pred_region
      %s2072 = ssub.s32 %s12, 2
      // Predicated region
      $region53: #{tpu_custom_call.1} parent=51 // pred_check
        %p2073 = pneg %p172
      $region54: #{tpu_custom_call.1} parent=51 // pred_check_branch
        %2075 = sbr.rel (%p2073) target = $region56
      $region55: #{tpu_custom_call.1} parent=51 // pred_region
        %s2076 = smul.u32 20, %s18
        %p2077 = scmp.lt.s32.totalorder %s2076, 79
        %s2078 = scalar_select %p2077, %s2076, 79
        %s2079 = smul.addr %s2078, 4
        %s2080 = scalar_lea.vmem %s6, %s2079
      $region56: #{tpu_custom_call.1} parent=51 // pred_fallthru
        _
    $region52: #{tpu_custom_call.1} parent=5 // pred_fallthru
      _
  $region6: #{tpu_custom_call.1} parent=0 // loop_footer
    %s16 = sadd.s32 1, %s12
  $region7: #{tpu_custom_call.1} parent=0 // loop_footer_branch
    %11 = sbr.rel target = $region3
  $region8: #{tpu_custom_call.1} parent=0 // loop_exit
    _

</llo_original>
